<compile_context>
chip_gen: v6e
topology: v6e:2x2x1
jax: 0.10.0
libtpu: 0.0.40
codegen_flags: <defaults>
</compile_context>

<pallas_src>
import functools

import jax
import jax.numpy as jnp
from jax.experimental import pallas as pl
from jax.experimental.pallas import tpu as pltpu

_NEG = -1e30  # finite "minus infinity" for padded vocab columns (no nan from exp)


# -----------------------------------------------------------------------------
# Helpers
# -----------------------------------------------------------------------------
def _resident(shape):
    """Full-array block, constant index map -> VMEM-resident across the grid."""
    blk = (0,) * len(shape)
    return pl.BlockSpec(shape, lambda j, _blk=blk: _blk)


def _choose_vocab_tiling(vocab_size, vocab_tile=None):
    """Pick the vocab tile TN (lane-dense, 128-multiple when tiled) and padding."""
    V = vocab_size
    if vocab_tile is None:
        vocab_tile = V if V <= 2048 else 2048
    TN = min(vocab_tile, V)
    if TN >= V:
        return V, V, 1                      # single tile == full array, no padding
    assert TN % 128 == 0, "tiled vocab requires a 128-multiple tile"
    Vp = ((V + TN - 1) // TN) * TN
    return TN, Vp, Vp // TN


def _vmem_limit_bytes():
    """~3/4 of physical VMEM (v5e/v6e: 128 MiB -> 96 MiB, v7x: 64 MiB -> 48 MiB)."""
    try:
        cap = pltpu.get_tpu_info().vmem_capacity_bytes
    except Exception:
        cap = 64 * 1024 * 1024
    return int(min(100 * 1024 * 1024, cap * 3 // 4))


# -----------------------------------------------------------------------------
# Kernel 1: GRU step + attention + context_to_out head (runs once)
# -----------------------------------------------------------------------------
def make_prologue_kernel(num_layer, hidden_size, fuse_gates):
    L, H = num_layer, hidden_size

    def kernel(*refs):
        emb_ref, h0_ref, enc_ref = refs[0:3]
        gru_refs = refs[3:3 + 4 * L]
        w_attn_ref, wco_ref, wcc_ref, bc2o_ref = refs[3 + 4 * L:7 + 4 * L]
        hid_ref, ctx_ref, t_ref = refs[7 + 4 * L:10 + 4 * L]

        x = emb_ref[...]                                          # (Bp, E) f32
        for l in range(L):
            wih, whh, bih, bhh = gru_refs[4 * l:4 * l + 4]
            h_prev = h0_ref[l]                                    # (Bp, H) f32
            xb = x.astype(jnp.bfloat16)
            hb = h_prev.astype(jnp.bfloat16)
            if fuse_gates:
                # One (in,3H) and one (H,3H) matmul; gate slices are lane
                # aligned because H % 128 == 0.  PyTorch gate order: r, z, n.
                gi = jnp.dot(xb, wih[...], preferred_element_type=jnp.float32) + bih[...]
                gh = jnp.dot(hb, whh[...], preferred_element_type=jnp.float32) + bhh[...]
                gi_r, gi_z, gi_n = gi[:, :H], gi[:, H:2 * H], gi[:, 2 * H:]
                gh_r, gh_z, gh_n = gh[:, :H], gh[:, H:2 * H], gh[:, 2 * H:]
            else:
                # Per-gate stacked weights (tile-aligned for any H).
                gi_r = jnp.dot(xb, wih[0], preferred_element_type=jnp.float32) + bih[0]
                gi_z = jnp.dot(xb, wih[1], preferred_element_type=jnp.float32) + bih[1]
                gi_n = jnp.dot(xb, wih[2], preferred_element_type=jnp.float32) + bih[2]
                gh_r = jnp.dot(hb, whh[0], preferred_element_type=jnp.float32) + bhh[0]
                gh_z = jnp.dot(hb, whh[1], preferred_element_type=jnp.float32) + bhh[1]
                gh_n = jnp.dot(hb, whh[2], preferred_element_type=jnp.float32) + bhh[2]
            r = jax.nn.sigmoid(gi_r + gh_r)
            z = jax.nn.sigmoid(gi_z + gh_z)
            n = jnp.tanh(gi_n + r * gh_n)
            h_new = (1.0 - z) * n + z * h_prev
            hid_ref[l] = h_new
            x = h_new
        output = x                                                # (Bp, H) f32

        # Attention method='general', batch-major (Bp, S, H).  enc is resident
        # in VMEM as bf16; softmax / exp math in f32.
        # TODO(synk): chunk over S with an online softmax for long sequences.
        q = jnp.dot(output.astype(jnp.bfloat16), w_attn_ref[...],
                    preferred_element_type=jnp.float32)           # (Bp, H)
        enc = enc_ref[...].astype(jnp.float32)                    # (Bp, S, H)
        energies = jnp.sum(enc * q[:, None, :], axis=-1)          # (Bp, S)
        m = jnp.max(energies, axis=-1, keepdims=True)
        e = jnp.exp(energies - m)
        attn = e / jnp.sum(e, axis=-1, keepdims=True)             # softmax over S
        context = jnp.sum(attn[:, :, None] * enc, axis=1)         # (Bp, H)
        ctx_ref[0] = context

        # split-concat head: cat([out, ctx]) @ Wc.T == out @ W1 + ctx @ W2
        pre = (jnp.dot(output.astype(jnp.bfloat16), wco_ref[...],
                       preferred_element_type=jnp.float32)
               + jnp.dot(context.astype(jnp.bfloat16), wcc_ref[...],
                         preferred_element_type=jnp.float32)
               + bc2o_ref[...])
        t_ref[...] = jnp.tanh(pre).astype(jnp.bfloat16)

    return kernel


# -----------------------------------------------------------------------------
# Kernel 2: streamed output projection, one independent vocab tile per step
# -----------------------------------------------------------------------------
def vocab_tile_kernel(t_ref, wout_ref, bout_ref, logits_ref, m_ref, s_ref):
    # Lane-dense logits tile + its partial softmax stats.  Every tile is
    # independent (no carried LSE), so the vocab axis is a "parallel" grid
    # axis (megacore splits the dominant w_out HBM stream on v7x).
    logits = jnp.dot(t_ref[...], wout_ref[...],
                     preferred_element_type=jnp.float32) + bout_ref[...]
    logits_ref[...] = logits
    m = jnp.max(logits, axis=-1, keepdims=True)                   # (Bp, 1)
    s = jnp.sum(jnp.exp(logits - m), axis=-1, keepdims=True)      # (Bp, 1)
    m_ref[0] = m
    s_ref[0] = s


# -----------------------------------------------------------------------------
# Wrapper
# -----------------------------------------------------------------------------
def attent_gru_decoder_forward(kparams, inputs, hidden, batch_size, last_context,
                               encoder_output, *, num_layer, hidden_size,
                               vocab_size, vocab_tile=None):
    """Matches AtttentGRUDecoder.forward (eval). `last_context` unused, as in torch."""
    del last_context
    B, H, V, L = batch_size, hidden_size, vocab_size, num_layer
    S = encoder_output.shape[0]
    E = kparams["emb_table"].shape[1]
    Bp = ((B + 15) // 16) * 16                    # bf16 sublane packing
    TN, Vp, NV = _choose_vocab_tiling(V, vocab_tile)
    fuse_gates = (H % 128 == 0)
    vmem_limit = _vmem_limit_bytes()

    # Embedding lookup glue.
    # TODO(synk): fuse the gather via scalar prefetch + pl.Element row blocks.
    emb = jnp.take(kparams["emb_table"], inputs.reshape(B), axis=0)       # (B, E)

    emb_p = jnp.zeros((Bp, E), jnp.float32).at[:B].set(emb)
    hid_p = jnp.zeros((L, Bp, H), jnp.float32).at[:, :B].set(hidden)
    enc_p = jnp.zeros((Bp, S, H), jnp.bfloat16).at[:B].set(
        jnp.transpose(encoder_output, (1, 0, 2)).astype(jnp.bfloat16))    # (Bp, S, H)

    # ---------------- call 1: GRU + attention + head (grid of 1) --------------
    args_a = [emb_p, hid_p, enc_p]
    specs_a = [_resident((Bp, E)), _resident((L, Bp, H)), _resident((Bp, S, H))]
    for l in range(L):
        g = kparams["gru"][l]
        in_l = E if l == 0 else H
        args_a += [g["wih"], g["whh"], g["bih"], g["bhh"]]
        if fuse_gates:
            specs_a += [_resident((in_l, 3 * H)), _resident((H, 3 * H)),
                        _resident((1, 3 * H)), _resident((1, 3 * H))]
        else:
            specs_a += [_resident((3, in_l, H)), _resident((3, H, H)),
                        _resident((3, 1, H)), _resident((3, 1, H))]
    args_a += [kparams["w_attn"], kparams["w_c2o_o_t"], kparams["w_c2o_c_t"],
               kparams["b_c2o"]]
    specs_a += [_resident((H, H)), _resident((H, H)), _resident((H, H)),
                _resident((1, H))]

    prologue = pl.pallas_call(
        make_prologue_kernel(L, H, fuse_gates),
        out_shape=(jax.ShapeDtypeStruct((L, Bp, H), jnp.float32),    # new hidden
                   jax.ShapeDtypeStruct((1, Bp, H), jnp.float32),    # context
                   jax.ShapeDtypeStruct((Bp, H), jnp.bfloat16)),     # tanh head
        grid_spec=pltpu.PrefetchScalarGridSpec(
            num_scalar_prefetch=0, grid=(1,),
            in_specs=specs_a,
            out_specs=(_resident((L, Bp, H)), _resident((1, Bp, H)),
                       _resident((Bp, H)))),
        compiler_params=pltpu.CompilerParams(
            dimension_semantics=("arbitrary",),
            vmem_limit_bytes=vmem_limit),
        # Safe only because both hidden specs are fully resident (input read
        # once before any writeback); do not tile either side per grid step.
        input_output_aliases={1: 0},
    )
    new_hidden, context, t_bf = prologue(*args_a)

    # ---------------- call 2: streamed output projection ----------------------
    nbuf = 3 if NV >= 3 else 2

    def _streamed(shape, imap):
        if NV >= 3:
            try:
                return pl.BlockSpec(shape, imap, pipeline_mode=pl.Buffered(3))
            except Exception:
                pass
        return pl.BlockSpec(shape, imap)

    # Rough VMEM budget for the streamed kernel (must fit on v7x's 64 MiB too).
    resident_bytes = (Bp * H * 2                         # resident t (bf16)
                      + nbuf * (H * TN * 2 + TN * 4)     # streamed w_out / b_out
                      + 2 * Bp * TN * 4                  # pipelined logits tile
                      + 4 * Bp * 4 * 2)                  # stats tiles
    assert resident_bytes < vmem_limit, (
        f"vocab tile {TN} too large for VMEM budget {vmem_limit}")

    vocab_fn = pl.pallas_call(
        vocab_tile_kernel,
        out_shape=(jax.ShapeDtypeStruct((Bp, Vp), jnp.float32),     # logits
                   jax.ShapeDtypeStruct((NV, Bp, 1), jnp.float32),  # per-tile max
                   jax.ShapeDtypeStruct((NV, Bp, 1), jnp.float32)),  # per-tile sumexp
        grid_spec=pltpu.PrefetchScalarGridSpec(
            num_scalar_prefetch=0, grid=(NV,),
            in_specs=[_resident((Bp, H)),
                      _streamed((H, TN), lambda j: (0, j)),
                      _streamed((1, TN), lambda j: (0, j))],
            out_specs=(pl.BlockSpec((Bp, TN), lambda j: (0, j)),
                       pl.BlockSpec((1, Bp, 1), lambda j: (j, 0, 0)),
                       pl.BlockSpec((1, Bp, 1), lambda j: (j, 0, 0)))),
        compiler_params=pltpu.CompilerParams(
            dimension_semantics=("parallel",),      # independent vocab tiles
            vmem_limit_bytes=vmem_limit),
    )
    logits_p, m_t, s_t = vocab_fn(t_bf, kparams["w_out_t"], kparams["b_out"])

    # Combine per-tile softmax stats into the global LSE (tiny) and finalize.
    m = jnp.max(m_t, axis=0)                               # (Bp, 1)
    s = jnp.sum(s_t * jnp.exp(m_t - m), axis=0)            # (Bp, 1)
    lse = m + jnp.log(s)                                   # (Bp, 1)

    logits = logits_p[:B, :V]
    logp = logits - lse[:B]                                # LogSoftmax(dim=1)
    return logp, logits, new_hidden[:, :B], context[:, :B]


# -----------------------------------------------------------------------------
# Parameters (PyTorch layouts) + one-time conversion to kernel layout
# -----------------------------------------------------------------------------
def init_params(key, input_size, hidden_size, num_layer, vocab_size):
    """Synthetic parameters in PyTorch layouts (as nn.GRU / nn.Linear store them)."""
    H, E, V = hidden_size, input_size, vocab_size
    keys = iter(jax.random.split(key, 6 + 4 * num_layer))
    s = 0.1
    p = {"emb_table": s * jax.random.normal(next(keys), (V, E), jnp.float32), "gru": []}
    for l in range(num_layer):
        in_l = E if l == 0 else H
        p["gru"].append(dict(
            wih=s * jax.random.normal(next(keys), (3 * H, in_l), jnp.float32),
            whh=s * jax.random.normal(next(keys), (3 * H, H), jnp.float32),
            bih=s * jax.random.normal(next(keys), (3 * H,), jnp.float32),
            bhh=s * jax.random.normal(next(keys), (3 * H,), jnp.float32)))
    p["w_attn"] = s * jax.random.normal(next(keys), (H, H), jnp.float32)
    p["w_c2o"] = s * jax.random.normal(next(keys), (H, 2 * H), jnp.float32)
    p["b_c2o"] = s * jax.random.normal(next(keys), (H,), jnp.float32)
    p["w_out"] = s * jax.random.normal(next(keys), (V, H), jnp.float32)
    p["b_out"] = s * jax.random.normal(next(keys), (V,), jnp.float32)
    return p


def prepare_kernel_params(tp, *, num_layer, hidden_size, vocab_tile=None):
    """One-time conversion: transpose / gate layout / bf16 cast / vocab padding."""
    H = hidden_size
    fuse_gates = (H % 128 == 0)
    kp = {"emb_table": tp["emb_table"], "gru": []}
    for l in range(num_layer):
        g = tp["gru"][l]
        if fuse_gates:
            kp["gru"].append(dict(
                wih=g["wih"].T.astype(jnp.bfloat16),              # (in, 3H)
                whh=g["whh"].T.astype(jnp.bfloat16),              # (H, 3H)
                bih=g["bih"].reshape(1, 3 * H),                   # f32
                bhh=g["bhh"].reshape(1, 3 * H)))                  # f32
        else:
            kp["gru"].append(dict(
                wih=jnp.stack([g["wih"][i * H:(i + 1) * H, :].T for i in range(3)],
                              axis=0).astype(jnp.bfloat16),       # (3, in, H)
                whh=jnp.stack([g["whh"][i * H:(i + 1) * H, :].T for i in range(3)],
                              axis=0).astype(jnp.bfloat16),       # (3, H, H)
                bih=jnp.stack([g["bih"][i * H:(i + 1) * H].reshape(1, H)
                               for i in range(3)], axis=0),       # (3, 1, H) f32
                bhh=jnp.stack([g["bhh"][i * H:(i + 1) * H].reshape(1, H)
                               for i in range(3)], axis=0)))      # (3, 1, H) f32
    kp["w_attn"] = tp["w_attn"].astype(jnp.bfloat16)              # (H, H)
    kp["w_c2o_o_t"] = tp["w_c2o"][:, :H].T.astype(jnp.bfloat16)   # (H, H)
    kp["w_c2o_c_t"] = tp["w_c2o"][:, H:].T.astype(jnp.bfloat16)   # (H, H)
    kp["b_c2o"] = tp["b_c2o"].reshape(1, H)                       # f32

    V = tp["w_out"].shape[0]
    TN, Vp, _ = _choose_vocab_tiling(V, vocab_tile)
    del TN
    w_out_t = tp["w_out"].T.astype(jnp.bfloat16)                  # (H, V)
    b_out = tp["b_out"].reshape(1, V)                             # f32
    if Vp > V:
        # Padded vocab columns: zero weights, -1e30 bias -> exp underflows to 0
        # in the in-kernel softmax stats; the wrapper slices them off.
        w_out_t = jnp.pad(w_out_t, ((0, 0), (0, Vp - V)))
        b_out = jnp.pad(b_out, ((0, 0), (0, Vp - V)), constant_values=_NEG)
    kp["w_out_t"] = w_out_t                                       # (H, Vp) bf16
    kp["b_out"] = b_out                                           # (1, Vp) f32
    # TODO(synk): int8 (v5e/v6e) / fp8 (v7x) quantized w_out_t with per-column
    #             scales (applied post-matmul) to halve the dominant HBM stream.
    return kp


# -----------------------------------------------------------------------------
# Pure-JAX f32 reference (same math as the torch module)
# -----------------------------------------------------------------------------
def reference_forward(tp, inputs, hidden, batch_size, encoder_output,
                      *, num_layer, hidden_size):
    B, H, L = batch_size, hidden_size, num_layer
    x = jnp.take(tp["emb_table"], inputs.reshape(B), axis=0)
    new_h = []
    for l in range(L):
        g = tp["gru"][l]
        h_prev = hidden[l]
        gi = x @ g["wih"].T + g["bih"]
        gh = h_prev @ g["whh"].T + g["bhh"]
        r = jax.nn.sigmoid(gi[:, :H] + gh[:, :H])
        z = jax.nn.sigmoid(gi[:, H:2 * H] + gh[:, H:2 * H])
        n = jnp.tanh(gi[:, 2 * H:] + r * gh[:, 2 * H:])
        h_new = (1.0 - z) * n + z * h_prev
        new_h.append(h_new)
        x = h_new
    output = x
    q = output @ tp["w_attn"]
    energies = jnp.einsum("sbh,bh->sb", encoder_output, q)
    attn = jax.nn.softmax(energies, axis=0)
    context = jnp.einsum("sb,sbh->bh", attn, encoder_output)
    cat = jnp.concatenate([output, context], axis=1)
    t = jnp.tanh(cat @ tp["w_c2o"].T + tp["b_c2o"])
    logits = t @ tp["w_out"].T + tp["b_out"]
    logp = jax.nn.log_softmax(logits, axis=1)
    return logp, logits, jnp.stack(new_h, axis=0), context[None]


# -----------------------------------------------------------------------------
# Tests
# -----------------------------------------------------------------------------
def _run_case(name, *, input_size, hidden_size, num_layer, vocab_size, seq_len,
              batch_size, vocab_tile=None):
    key = jax.random.PRNGKey(0)
    k_p, k_tok, k_h, k_enc = jax.random.split(key, 4)

    torch_params = init_params(k_p, input_size, hidden_size, num_layer, vocab_size)
    kparams = prepare_kernel_params(torch_params, num_layer=num_layer,
                                    hidden_size=hidden_size, vocab_tile=vocab_tile)

    inputs = jax.random.randint(k_tok, (batch_size,), 0, vocab_size, jnp.int32)
    hidden = 0.1 * jax.random.normal(k_h, (num_layer, batch_size, hidden_size),
                                     jnp.float32)
    encoder_output = 0.1 * jax.random.normal(
        k_enc, (seq_len, batch_size, hidden_size), jnp.float32)
    last_context = jnp.zeros((1, batch_size, hidden_size), jnp.float32)  # unused

    fwd = jax.jit(
        functools.partial(attent_gru_decoder_forward, num_layer=num_layer,
                          hidden_size=hidden_size, vocab_size=vocab_size,
                          vocab_tile=vocab_tile),
        static_argnums=(3,))

    logp, logits, new_hidden, context = fwd(
        kparams, inputs, hidden, batch_size, last_context, encoder_output)
    jax.block_until_ready((logp, logits, new_hidden, context))

    r_logp, r_logits, r_hidden, r_ctx = reference_forward(
        torch_params, inputs, hidden, batch_size, encoder_output,
        num_layer=num_layer, hidden_size=hidden_size)

    # bf16 MXU operands / bf16-resident encoder with f32 accumulation,
    # hence the loosened tolerance vs. the pure-f32 reference.
    assert logp.shape == (batch_size, vocab_size), name
    assert jnp.allclose(logp, r_logp, atol=2e-2, rtol=2e-2), name
    assert jnp.allclose(logits, r_logits, atol=2e-2, rtol=2e-2), name
    assert jnp.allclose(new_hidden, r_hidden, atol=2e-2, rtol=2e-2), name
    assert jnp.allclose(context, r_ctx, atol=2e-2, rtol=2e-2), name


if __name__ == "__main__":
    # Small config: per-gate GRU path (H % 128 != 0), single vocab tile.
    _run_case("small", input_size=16, hidden_size=32, num_layer=2,
              vocab_size=64, seq_len=8, batch_size=2)
    # Tiled config: fused-gate GRU path (H = 128), multi-tile vocab with
    # padding (V = 300, TN = 128 -> 3 parallel tiles, Buffered(3) stream).
    _run_case("tiled", input_size=16, hidden_size=128, num_layer=2,
              vocab_size=300, seq_len=8, batch_size=2, vocab_tile=128)
    print("KERNEL_OK")
</pallas_src>

<mosaic_0001>
module attributes {stable_mosaic.version = 11 : i64} {
  func.func @vocab_tile_kernel(%arg0: i32, %arg1: memref<16x32xbf16, #tpu.memory_space<vmem>>, %arg2: memref<32x64xbf16, #tpu.memory_space<vmem>>, %arg3: memref<1x64xf32, #tpu.memory_space<vmem>>, %arg4: memref<16x64xf32, #tpu.memory_space<vmem>>, %arg5: memref<1x16x1xf32, #tpu.memory_space<vmem>>, %arg6: memref<1x16x1xf32, #tpu.memory_space<vmem>>) attributes {dimension_semantics = [#tpu.dimension_semantics<parallel>], iteration_bounds = array<i64: 1>, scalar_prefetch = 0 : i64, scratch_operands = 0 : i64, tpu.core_type = #tpu.core_type<tc>, window_params = [{pipeline_mode = #tpu.pipeline_mode<synchronous>, transform_indices = @transform_0, window_bounds = array<i64: 16, 32>}, {transform_indices = @transform_1, window_bounds = array<i64: 32, 64>}, {transform_indices = @transform_2, window_bounds = array<i64: 1, 64>}, {transform_indices = @transform_3, window_bounds = array<i64: 16, 64>}, {transform_indices = @transform_4, window_bounds = array<i64: 1, 16, 1>}, {transform_indices = @transform_5, window_bounds = array<i64: 1, 16, 1>}]} {
    %c0 = arith.constant 0 : index
    %c0_0 = arith.constant 0 : index
    %0 = vector.load %arg1[%c0, %c0_0] : memref<16x32xbf16, #tpu.memory_space<vmem>>, vector<16x32xbf16>
    %c0_1 = arith.constant 0 : index
    %c0_2 = arith.constant 0 : index
    %1 = vector.load %arg2[%c0_1, %c0_2] : memref<32x64xbf16, #tpu.memory_space<vmem>>, vector<32x64xbf16>
    %cst = arith.constant dense<0.000000e+00> : vector<16x64xf32>
    %2 = tpu.matmul %0, %1, %cst {dimension_numbers = #tpu.dot_dimension_numbers<[1], [0], [0], [1], [0, 0, 1, 1], [], []>} : vector<16x32xbf16>, vector<32x64xbf16>, vector<16x64xf32> -> vector<16x64xf32>
    %c0_3 = arith.constant 0 : index
    %c0_4 = arith.constant 0 : index
    %3 = vector.load %arg3[%c0_3, %c0_4] : memref<1x64xf32, #tpu.memory_space<vmem>>, vector<1x64xf32>
    %4 = vector.broadcast %3 : vector<1x64xf32> to vector<16x64xf32>
    %5 = arith.addf %2, %4 : vector<16x64xf32>
    %c0_5 = arith.constant 0 : index
    %c0_6 = arith.constant 0 : index
    %6 = vector.load %arg4[%c0_5, %c0_6] : memref<16x64xf32, #tpu.memory_space<vmem>>, vector<16x64xf32>
    tpu.vector_store %arg4[%c0_5, %c0_6], %5 {strides = array<i32>} : memref<16x64xf32, #tpu.memory_space<vmem>>, vector<16x64xf32>,
    %cst_7 = arith.constant dense<0xFF800000> : vector<16xf32>
    %7 = vector.multi_reduction <maximumf>, %5, %cst_7 [1] : vector<16x64xf32> to vector<16xf32>
    %8 = vector.shape_cast %7 : vector<16xf32> to vector<16x1xf32>
    %9 = vector.broadcast %8 : vector<16x1xf32> to vector<16x64xf32>
    %10 = arith.subf %5, %9 : vector<16x64xf32>
    %11 = math.exp %10 : vector<16x64xf32>
    %cst_8 = arith.constant dense<0.000000e+00> : vector<16xf32>
    %12 = vector.multi_reduction <add>, %11, %cst_8 [1] : vector<16x64xf32> to vector<16xf32>
    %13 = vector.shape_cast %12 : vector<16xf32> to vector<16x1xf32>
    %c0_9 = arith.constant 0 : index
    %c0_10 = arith.constant 0 : index
    %c0_11 = arith.constant 0 : index
    %14 = vector.load %arg5[%c0_9, %c0_10, %c0_11] : memref<1x16x1xf32, #tpu.memory_space<vmem>>, vector<1x16x1xf32>
    %15 = vector.shape_cast %14 : vector<1x16x1xf32> to vector<16x1xf32>
    %16 = vector.shape_cast %8 : vector<16x1xf32> to vector<1x16x1xf32>
    tpu.vector_store %arg5[%c0_9, %c0_10, %c0_11], %16 {strides = array<i32>} : memref<1x16x1xf32, #tpu.memory_space<vmem>>, vector<1x16x1xf32>,
    %c0_12 = arith.constant 0 : index
    %c0_13 = arith.constant 0 : index
    %c0_14 = arith.constant 0 : index
    %17 = vector.load %arg6[%c0_12, %c0_13, %c0_14] : memref<1x16x1xf32, #tpu.memory_space<vmem>>, vector<1x16x1xf32>
    %18 = vector.shape_cast %17 : vector<1x16x1xf32> to vector<16x1xf32>
    %19 = vector.shape_cast %13 : vector<16x1xf32> to vector<1x16x1xf32>
    tpu.vector_store %arg6[%c0_12, %c0_13, %c0_14], %19 {strides = array<i32>} : memref<1x16x1xf32, #tpu.memory_space<vmem>>, vector<1x16x1xf32>,
    return
  }
  func.func @transform_0(%arg0: i32) -> (i32, i32) {
    %c0_i32 = arith.constant 0 : i32
    %c0_i32_0 = arith.constant 0 : i32
    %c0_i32_1 = arith.constant 0 : i32
    return %c0_i32, %c0_i32_0 : i32, i32
  }
  func.func @transform_1(%arg0: i32) -> (i32, i32) {
    %c0_i32 = arith.constant 0 : i32
    %c0_i32_0 = arith.constant 0 : i32
    return %c0_i32, %arg0 : i32, i32
  }
  func.func @transform_2(%arg0: i32) -> (i32, i32) {
    %c0_i32 = arith.constant 0 : i32
    %c0_i32_0 = arith.constant 0 : i32
    return %c0_i32, %arg0 : i32, i32
  }
  func.func @transform_3(%arg0: i32) -> (i32, i32) {
    %c0_i32 = arith.constant 0 : i32
    %c0_i32_0 = arith.constant 0 : i32
    return %c0_i32, %arg0 : i32, i32
  }
  func.func @transform_4(%arg0: i32) -> (i32, i32, i32) {
    %c0_i32 = arith.constant 0 : i32
    %c0_i32_0 = arith.constant 0 : i32
    %c0_i32_1 = arith.constant 0 : i32
    return %arg0, %c0_i32, %c0_i32_0 : i32, i32, i32
  }
  func.func @transform_5(%arg0: i32) -> (i32, i32, i32) {
    %c0_i32 = arith.constant 0 : i32
    %c0_i32_0 = arith.constant 0 : i32
    %c0_i32_1 = arith.constant 0 : i32
    return %arg0, %c0_i32, %c0_i32_0 : i32, i32, i32
  }
}

module attributes {stable_mosaic.version = 11 : i64} {
  func.func @kernel(%arg0: i32, %arg1: memref<16x16xf32, #tpu.memory_space<vmem>>, %arg2: memref<2x16x32xf32, #tpu.memory_space<vmem>>, %arg3: memref<16x8x32xbf16, #tpu.memory_space<vmem>>, %arg4: memref<3x16x32xbf16, #tpu.memory_space<vmem>>, %arg5: memref<3x32x32xbf16, #tpu.memory_space<vmem>>, %arg6: memref<3x1x32xf32, #tpu.memory_space<vmem>>, %arg7: memref<3x1x32xf32, #tpu.memory_space<vmem>>, %arg8: memref<3x32x32xbf16, #tpu.memory_space<vmem>>, %arg9: memref<3x32x32xbf16, #tpu.memory_space<vmem>>, %arg10: memref<3x1x32xf32, #tpu.memory_space<vmem>>, %arg11: memref<3x1x32xf32, #tpu.memory_space<vmem>>, %arg12: memref<32x32xbf16, #tpu.memory_space<vmem>>, %arg13: memref<32x32xbf16, #tpu.memory_space<vmem>>, %arg14: memref<32x32xbf16, #tpu.memory_space<vmem>>, %arg15: memref<1x32xf32, #tpu.memory_space<vmem>>, %arg16: memref<2x16x32xf32, #tpu.memory_space<vmem>>, %arg17: memref<1x16x32xf32, #tpu.memory_space<vmem>>, %arg18: memref<16x32xbf16, #tpu.memory_space<vmem>>) attributes {dimension_semantics = [#tpu.dimension_semantics<arbitrary>], iteration_bounds = array<i64: 1>, scalar_prefetch = 0 : i64, scratch_operands = 0 : i64, tpu.core_type = #tpu.core_type<tc>, window_params = [{pipeline_mode = #tpu.pipeline_mode<synchronous>, transform_indices = @transform_0, window_bounds = array<i64: 16, 16>}, {pipeline_mode = #tpu.pipeline_mode<synchronous>, transform_indices = @transform_1, window_bounds = array<i64: 2, 16, 32>}, {pipeline_mode = #tpu.pipeline_mode<synchronous>, transform_indices = @transform_2, window_bounds = array<i64: 16, 8, 32>}, {pipeline_mode = #tpu.pipeline_mode<synchronous>, transform_indices = @transform_3, window_bounds = array<i64: 3, 16, 32>}, {pipeline_mode = #tpu.pipeline_mode<synchronous>, transform_indices = @transform_4, window_bounds = array<i64: 3, 32, 32>}, {pipeline_mode = #tpu.pipeline_mode<synchronous>, transform_indices = @transform_5, window_bounds = array<i64: 3, 1, 32>}, {pipeline_mode = #tpu.pipeline_mode<synchronous>, transform_indices = @transform_6, window_bounds = array<i64: 3, 1, 32>}, {pipeline_mode = #tpu.pipeline_mode<synchronous>, transform_indices = @transform_7, window_bounds = array<i64: 3, 32, 32>}, {pipeline_mode = #tpu.pipeline_mode<synchronous>, transform_indices = @transform_8, window_bounds = array<i64: 3, 32, 32>}, {pipeline_mode = #tpu.pipeline_mode<synchronous>, transform_indices = @transform_9, window_bounds = array<i64: 3, 1, 32>}, {pipeline_mode = #tpu.pipeline_mode<synchronous>, transform_indices = @transform_10, window_bounds = array<i64: 3, 1, 32>}, {pipeline_mode = #tpu.pipeline_mode<synchronous>, transform_indices = @transform_11, window_bounds = array<i64: 32, 32>}, {pipeline_mode = #tpu.pipeline_mode<synchronous>, transform_indices = @transform_12, window_bounds = array<i64: 32, 32>}, {pipeline_mode = #tpu.pipeline_mode<synchronous>, transform_indices = @transform_13, window_bounds = array<i64: 32, 32>}, {pipeline_mode = #tpu.pipeline_mode<synchronous>, transform_indices = @transform_14, window_bounds = array<i64: 1, 32>}, {pipeline_mode = #tpu.pipeline_mode<synchronous>, transform_indices = @transform_15, window_bounds = array<i64: 2, 16, 32>}, {pipeline_mode = #tpu.pipeline_mode<synchronous>, transform_indices = @transform_16, window_bounds = array<i64: 1, 16, 32>}, {pipeline_mode = #tpu.pipeline_mode<synchronous>, transform_indices = @transform_17, window_bounds = array<i64: 16, 32>}]} {
    %c0 = arith.constant 0 : index
    %c0_0 = arith.constant 0 : index
    %0 = vector.load %arg1[%c0, %c0_0] : memref<16x16xf32, #tpu.memory_space<vmem>>, vector<16x16xf32>
    %c0_1 = arith.constant 0 : index
    %c0_2 = arith.constant 0 : index
    %c0_3 = arith.constant 0 : index
    %1 = vector.load %arg2[%c0_1, %c0_2, %c0_3] : memref<2x16x32xf32, #tpu.memory_space<vmem>>, vector<1x16x32xf32>
    %2 = vector.shape_cast %1 : vector<1x16x32xf32> to vector<16x32xf32>
    %3 = arith.truncf %0 : vector<16x16xf32> to vector<16x16xbf16>
    %4 = arith.truncf %2 : vector<16x32xf32> to vector<16x32xbf16>
    %c0_4 = arith.constant 0 : index
    %c0_5 = arith.constant 0 : index
    %c0_6 = arith.constant 0 : index
    %5 = vector.load %arg4[%c0_4, %c0_5, %c0_6] : memref<3x16x32xbf16, #tpu.memory_space<vmem>>, vector<1x16x32xbf16>
    %6 = vector.shape_cast %5 : vector<1x16x32xbf16> to vector<16x32xbf16>
    %cst = arith.constant dense<0.000000e+00> : vector<16x32xf32>
    %7 = tpu.matmul %3, %6, %cst {dimension_numbers = #tpu.dot_dimension_numbers<[1], [0], [0], [1], [0, 0, 1, 1], [], []>} : vector<16x16xbf16>, vector<16x32xbf16>, vector<16x32xf32> -> vector<16x32xf32>
    %c0_7 = arith.constant 0 : index
    %c0_8 = arith.constant 0 : index
    %c0_9 = arith.constant 0 : index
    %8 = vector.load %arg6[%c0_7, %c0_8, %c0_9] : memref<3x1x32xf32, #tpu.memory_space<vmem>>, vector<1x1x32xf32>
    %9 = vector.shape_cast %8 : vector<1x1x32xf32> to vector<1x32xf32>
    %10 = vector.broadcast %9 : vector<1x32xf32> to vector<16x32xf32>
    %11 = arith.addf %7, %10 : vector<16x32xf32>
    %c1 = arith.constant 1 : index
    %c0_10 = arith.constant 0 : index
    %c0_11 = arith.constant 0 : index
    %12 = vector.load %arg4[%c1, %c0_10, %c0_11] : memref<3x16x32xbf16, #tpu.memory_space<vmem>>, vector<1x16x32xbf16>
    %13 = vector.shape_cast %12 : vector<1x16x32xbf16> to vector<16x32xbf16>
    %cst_12 = arith.constant dense<0.000000e+00> : vector<16x32xf32>
    %14 = tpu.matmul %3, %13, %cst_12 {dimension_numbers = #tpu.dot_dimension_numbers<[1], [0], [0], [1], [0, 0, 1, 1], [], []>} : vector<16x16xbf16>, vector<16x32xbf16>, vector<16x32xf32> -> vector<16x32xf32>
    %c1_13 = arith.constant 1 : index
    %c0_14 = arith.constant 0 : index
    %c0_15 = arith.constant 0 : index
    %15 = vector.load %arg6[%c1_13, %c0_14, %c0_15] : memref<3x1x32xf32, #tpu.memory_space<vmem>>, vector<1x1x32xf32>
    %16 = vector.shape_cast %15 : vector<1x1x32xf32> to vector<1x32xf32>
    %17 = vector.broadcast %16 : vector<1x32xf32> to vector<16x32xf32>
    %18 = arith.addf %14, %17 : vector<16x32xf32>
    %c2 = arith.constant 2 : index
    %c0_16 = arith.constant 0 : index
    %c0_17 = arith.constant 0 : index
    %19 = vector.load %arg4[%c2, %c0_16, %c0_17] : memref<3x16x32xbf16, #tpu.memory_space<vmem>>, vector<1x16x32xbf16>
    %20 = vector.shape_cast %19 : vector<1x16x32xbf16> to vector<16x32xbf16>
    %cst_18 = arith.constant dense<0.000000e+00> : vector<16x32xf32>
    %21 = tpu.matmul %3, %20, %cst_18 {dimension_numbers = #tpu.dot_dimension_numbers<[1], [0], [0], [1], [0, 0, 1, 1], [], []>} : vector<16x16xbf16>, vector<16x32xbf16>, vector<16x32xf32> -> vector<16x32xf32>
    %c2_19 = arith.constant 2 : index
    %c0_20 = arith.constant 0 : index
    %c0_21 = arith.constant 0 : index
    %22 = vector.load %arg6[%c2_19, %c0_20, %c0_21] : memref<3x1x32xf32, #tpu.memory_space<vmem>>, vector<1x1x32xf32>
    %23 = vector.shape_cast %22 : vector<1x1x32xf32> to vector<1x32xf32>
    %24 = vector.broadcast %23 : vector<1x32xf32> to vector<16x32xf32>
    %25 = arith.addf %21, %24 : vector<16x32xf32>
    %c0_22 = arith.constant 0 : index
    %c0_23 = arith.constant 0 : index
    %c0_24 = arith.constant 0 : index
    %26 = vector.load %arg5[%c0_22, %c0_23, %c0_24] : memref<3x32x32xbf16, #tpu.memory_space<vmem>>, vector<1x32x32xbf16>
    %27 = vector.shape_cast %26 : vector<1x32x32xbf16> to vector<32x32xbf16>
    %cst_25 = arith.constant dense<0.000000e+00> : vector<16x32xf32>
    %28 = tpu.matmul %4, %27, %cst_25 {dimension_numbers = #tpu.dot_dimension_numbers<[1], [0], [0], [1], [0, 0, 1, 1], [], []>} : vector<16x32xbf16>, vector<32x32xbf16>, vector<16x32xf32> -> vector<16x32xf32>
    %c0_26 = arith.constant 0 : index
    %c0_27 = arith.constant 0 : index
    %c0_28 = arith.constant 0 : index
    %29 = vector.load %arg7[%c0_26, %c0_27, %c0_28] : memref<3x1x32xf32, #tpu.memory_space<vmem>>, vector<1x1x32xf32>
    %30 = vector.shape_cast %29 : vector<1x1x32xf32> to vector<1x32xf32>
    %31 = vector.broadcast %30 : vector<1x32xf32> to vector<16x32xf32>
    %32 = arith.addf %28, %31 : vector<16x32xf32>
    %c1_29 = arith.constant 1 : index
    %c0_30 = arith.constant 0 : index
    %c0_31 = arith.constant 0 : index
    %33 = vector.load %arg5[%c1_29, %c0_30, %c0_31] : memref<3x32x32xbf16, #tpu.memory_space<vmem>>, vector<1x32x32xbf16>
    %34 = vector.shape_cast %33 : vector<1x32x32xbf16> to vector<32x32xbf16>
    %cst_32 = arith.constant dense<0.000000e+00> : vector<16x32xf32>
    %35 = tpu.matmul %4, %34, %cst_32 {dimension_numbers = #tpu.dot_dimension_numbers<[1], [0], [0], [1], [0, 0, 1, 1], [], []>} : vector<16x32xbf16>, vector<32x32xbf16>, vector<16x32xf32> -> vector<16x32xf32>
    %c1_33 = arith.constant 1 : index
    %c0_34 = arith.constant 0 : index
    %c0_35 = arith.constant 0 : index
    %36 = vector.load %arg7[%c1_33, %c0_34, %c0_35] : memref<3x1x32xf32, #tpu.memory_space<vmem>>, vector<1x1x32xf32>
    %37 = vector.shape_cast %36 : vector<1x1x32xf32> to vector<1x32xf32>
    %38 = vector.broadcast %37 : vector<1x32xf32> to vector<16x32xf32>
    %39 = arith.addf %35, %38 : vector<16x32xf32>
    %c2_36 = arith.constant 2 : index
    %c0_37 = arith.constant 0 : index
    %c0_38 = arith.constant 0 : index
    %40 = vector.load %arg5[%c2_36, %c0_37, %c0_38] : memref<3x32x32xbf16, #tpu.memory_space<vmem>>, vector<1x32x32xbf16>
    %41 = vector.shape_cast %40 : vector<1x32x32xbf16> to vector<32x32xbf16>
    %cst_39 = arith.constant dense<0.000000e+00> : vector<16x32xf32>
    %42 = tpu.matmul %4, %41, %cst_39 {dimension_numbers = #tpu.dot_dimension_numbers<[1], [0], [0], [1], [0, 0, 1, 1], [], []>} : vector<16x32xbf16>, vector<32x32xbf16>, vector<16x32xf32> -> vector<16x32xf32>
    %c2_40 = arith.constant 2 : index
    %c0_41 = arith.constant 0 : index
    %c0_42 = arith.constant 0 : index
    %43 = vector.load %arg7[%c2_40, %c0_41, %c0_42] : memref<3x1x32xf32, #tpu.memory_space<vmem>>, vector<1x1x32xf32>
    %44 = vector.shape_cast %43 : vector<1x1x32xf32> to vector<1x32xf32>
    %45 = vector.broadcast %44 : vector<1x32xf32> to vector<16x32xf32>
    %46 = arith.addf %42, %45 : vector<16x32xf32>
    %47 = arith.addf %11, %32 : vector<16x32xf32>
    %48 = arith.negf %47 : vector<16x32xf32>
    %49 = math.exp %48 : vector<16x32xf32>
    %cst_43 = arith.constant 1.000000e+00 : f32
    %50 = vector.broadcast %cst_43 : f32 to vector<16x32xf32>
    %51 = arith.addf %50, %49 : vector<16x32xf32>
    %52 = arith.divf %50, %51 : vector<16x32xf32>
    %53 = arith.addf %18, %39 : vector<16x32xf32>
    %54 = arith.negf %53 : vector<16x32xf32>
    %55 = math.exp %54 : vector<16x32xf32>
    %cst_44 = arith.constant 1.000000e+00 : f32
    %56 = vector.broadcast %cst_44 : f32 to vector<16x32xf32>
    %57 = arith.addf %56, %55 : vector<16x32xf32>
    %58 = arith.divf %56, %57 : vector<16x32xf32>
    %59 = arith.mulf %52, %46 : vector<16x32xf32>
    %60 = arith.addf %25, %59 : vector<16x32xf32>
    %61 = math.tanh %60 : vector<16x32xf32>
    %cst_45 = arith.constant 1.000000e+00 : f32
    %62 = vector.broadcast %cst_45 : f32 to vector<16x32xf32>
    %63 = arith.subf %62, %58 : vector<16x32xf32>
    %64 = arith.mulf %63, %61 : vector<16x32xf32>
    %65 = arith.mulf %58, %2 : vector<16x32xf32>
    %66 = arith.addf %64, %65 : vector<16x32xf32>
    %c0_46 = arith.constant 0 : index
    %c0_47 = arith.constant 0 : index
    %c0_48 = arith.constant 0 : index
    %67 = vector.load %arg16[%c0_46, %c0_47, %c0_48] : memref<2x16x32xf32, #tpu.memory_space<vmem>>, vector<1x16x32xf32>
    %68 = vector.shape_cast %67 : vector<1x16x32xf32> to vector<16x32xf32>
    %69 = vector.shape_cast %66 : vector<16x32xf32> to vector<1x16x32xf32>
    tpu.vector_store %arg16[%c0_46, %c0_47, %c0_48], %69 {strides = array<i32>} : memref<2x16x32xf32, #tpu.memory_space<vmem>>, vector<1x16x32xf32>,
    %c1_49 = arith.constant 1 : index
    %c0_50 = arith.constant 0 : index
    %c0_51 = arith.constant 0 : index
    %70 = vector.load %arg2[%c1_49, %c0_50, %c0_51] : memref<2x16x32xf32, #tpu.memory_space<vmem>>, vector<1x16x32xf32>
    %71 = vector.shape_cast %70 : vector<1x16x32xf32> to vector<16x32xf32>
    %72 = arith.truncf %66 : vector<16x32xf32> to vector<16x32xbf16>
    %73 = arith.truncf %71 : vector<16x32xf32> to vector<16x32xbf16>
    %c0_52 = arith.constant 0 : index
    %c0_53 = arith.constant 0 : index
    %c0_54 = arith.constant 0 : index
    %74 = vector.load %arg8[%c0_52, %c0_53, %c0_54] : memref<3x32x32xbf16, #tpu.memory_space<vmem>>, vector<1x32x32xbf16>
    %75 = vector.shape_cast %74 : vector<1x32x32xbf16> to vector<32x32xbf16>
    %cst_55 = arith.constant dense<0.000000e+00> : vector<16x32xf32>
    %76 = tpu.matmul %72, %75, %cst_55 {dimension_numbers = #tpu.dot_dimension_numbers<[1], [0], [0], [1], [0, 0, 1, 1], [], []>} : vector<16x32xbf16>, vector<32x32xbf16>, vector<16x32xf32> -> vector<16x32xf32>
    %c0_56 = arith.constant 0 : index
    %c0_57 = arith.constant 0 : index
    %c0_58 = arith.constant 0 : index
    %77 = vector.load %arg10[%c0_56, %c0_57, %c0_58] : memref<3x1x32xf32, #tpu.memory_space<vmem>>, vector<1x1x32xf32>
    %78 = vector.shape_cast %77 : vector<1x1x32xf32> to vector<1x32xf32>
    %79 = vector.broadcast %78 : vector<1x32xf32> to vector<16x32xf32>
    %80 = arith.addf %76, %79 : vector<16x32xf32>
    %c1_59 = arith.constant 1 : index
    %c0_60 = arith.constant 0 : index
    %c0_61 = arith.constant 0 : index
    %81 = vector.load %arg8[%c1_59, %c0_60, %c0_61] : memref<3x32x32xbf16, #tpu.memory_space<vmem>>, vector<1x32x32xbf16>
    %82 = vector.shape_cast %81 : vector<1x32x32xbf16> to vector<32x32xbf16>
    %cst_62 = arith.constant dense<0.000000e+00> : vector<16x32xf32>
    %83 = tpu.matmul %72, %82, %cst_62 {dimension_numbers = #tpu.dot_dimension_numbers<[1], [0], [0], [1], [0, 0, 1, 1], [], []>} : vector<16x32xbf16>, vector<32x32xbf16>, vector<16x32xf32> -> vector<16x32xf32>
    %c1_63 = arith.constant 1 : index
    %c0_64 = arith.constant 0 : index
    %c0_65 = arith.constant 0 : index
    %84 = vector.load %arg10[%c1_63, %c0_64, %c0_65] : memref<3x1x32xf32, #tpu.memory_space<vmem>>, vector<1x1x32xf32>
    %85 = vector.shape_cast %84 : vector<1x1x32xf32> to vector<1x32xf32>
    %86 = vector.broadcast %85 : vector<1x32xf32> to vector<16x32xf32>
    %87 = arith.addf %83, %86 : vector<16x32xf32>
    %c2_66 = arith.constant 2 : index
    %c0_67 = arith.constant 0 : index
    %c0_68 = arith.constant 0 : index
    %88 = vector.load %arg8[%c2_66, %c0_67, %c0_68] : memref<3x32x32xbf16, #tpu.memory_space<vmem>>, vector<1x32x32xbf16>
    %89 = vector.shape_cast %88 : vector<1x32x32xbf16> to vector<32x32xbf16>
    %cst_69 = arith.constant dense<0.000000e+00> : vector<16x32xf32>
    %90 = tpu.matmul %72, %89, %cst_69 {dimension_numbers = #tpu.dot_dimension_numbers<[1], [0], [0], [1], [0, 0, 1, 1], [], []>} : vector<16x32xbf16>, vector<32x32xbf16>, vector<16x32xf32> -> vector<16x32xf32>
    %c2_70 = arith.constant 2 : index
    %c0_71 = arith.constant 0 : index
    %c0_72 = arith.constant 0 : index
    %91 = vector.load %arg10[%c2_70, %c0_71, %c0_72] : memref<3x1x32xf32, #tpu.memory_space<vmem>>, vector<1x1x32xf32>
    %92 = vector.shape_cast %91 : vector<1x1x32xf32> to vector<1x32xf32>
    %93 = vector.broadcast %92 : vector<1x32xf32> to vector<16x32xf32>
    %94 = arith.addf %90, %93 : vector<16x32xf32>
    %c0_73 = arith.constant 0 : index
    %c0_74 = arith.constant 0 : index
    %c0_75 = arith.constant 0 : index
    %95 = vector.load %arg9[%c0_73, %c0_74, %c0_75] : memref<3x32x32xbf16, #tpu.memory_space<vmem>>, vector<1x32x32xbf16>
    %96 = vector.shape_cast %95 : vector<1x32x32xbf16> to vector<32x32xbf16>
    %cst_76 = arith.constant dense<0.000000e+00> : vector<16x32xf32>
    %97 = tpu.matmul %73, %96, %cst_76 {dimension_numbers = #tpu.dot_dimension_numbers<[1], [0], [0], [1], [0, 0, 1, 1], [], []>} : vector<16x32xbf16>, vector<32x32xbf16>, vector<16x32xf32> -> vector<16x32xf32>
    %c0_77 = arith.constant 0 : index
    %c0_78 = arith.constant 0 : index
    %c0_79 = arith.constant 0 : index
    %98 = vector.load %arg11[%c0_77, %c0_78, %c0_79] : memref<3x1x32xf32, #tpu.memory_space<vmem>>, vector<1x1x32xf32>
    %99 = vector.shape_cast %98 : vector<1x1x32xf32> to vector<1x32xf32>
    %100 = vector.broadcast %99 : vector<1x32xf32> to vector<16x32xf32>
    %101 = arith.addf %97, %100 : vector<16x32xf32>
    %c1_80 = arith.constant 1 : index
    %c0_81 = arith.constant 0 : index
    %c0_82 = arith.constant 0 : index
    %102 = vector.load %arg9[%c1_80, %c0_81, %c0_82] : memref<3x32x32xbf16, #tpu.memory_space<vmem>>, vector<1x32x32xbf16>
    %103 = vector.shape_cast %102 : vector<1x32x32xbf16> to vector<32x32xbf16>
    %cst_83 = arith.constant dense<0.000000e+00> : vector<16x32xf32>
    %104 = tpu.matmul %73, %103, %cst_83 {dimension_numbers = #tpu.dot_dimension_numbers<[1], [0], [0], [1], [0, 0, 1, 1], [], []>} : vector<16x32xbf16>, vector<32x32xbf16>, vector<16x32xf32> -> vector<16x32xf32>
    %c1_84 = arith.constant 1 : index
    %c0_85 = arith.constant 0 : index
    %c0_86 = arith.constant 0 : index
    %105 = vector.load %arg11[%c1_84, %c0_85, %c0_86] : memref<3x1x32xf32, #tpu.memory_space<vmem>>, vector<1x1x32xf32>
    %106 = vector.shape_cast %105 : vector<1x1x32xf32> to vector<1x32xf32>
    %107 = vector.broadcast %106 : vector<1x32xf32> to vector<16x32xf32>
    %108 = arith.addf %104, %107 : vector<16x32xf32>
    %c2_87 = arith.constant 2 : index
    %c0_88 = arith.constant 0 : index
    %c0_89 = arith.constant 0 : index
    %109 = vector.load %arg9[%c2_87, %c0_88, %c0_89] : memref<3x32x32xbf16, #tpu.memory_space<vmem>>, vector<1x32x32xbf16>
    %110 = vector.shape_cast %109 : vector<1x32x32xbf16> to vector<32x32xbf16>
    %cst_90 = arith.constant dense<0.000000e+00> : vector<16x32xf32>
    %111 = tpu.matmul %73, %110, %cst_90 {dimension_numbers = #tpu.dot_dimension_numbers<[1], [0], [0], [1], [0, 0, 1, 1], [], []>} : vector<16x32xbf16>, vector<32x32xbf16>, vector<16x32xf32> -> vector<16x32xf32>
    %c2_91 = arith.constant 2 : index
    %c0_92 = arith.constant 0 : index
    %c0_93 = arith.constant 0 : index
    %112 = vector.load %arg11[%c2_91, %c0_92, %c0_93] : memref<3x1x32xf32, #tpu.memory_space<vmem>>, vector<1x1x32xf32>
    %113 = vector.shape_cast %112 : vector<1x1x32xf32> to vector<1x32xf32>
    %114 = vector.broadcast %113 : vector<1x32xf32> to vector<16x32xf32>
    %115 = arith.addf %111, %114 : vector<16x32xf32>
    %116 = arith.addf %80, %101 : vector<16x32xf32>
    %117 = arith.negf %116 : vector<16x32xf32>
    %118 = math.exp %117 : vector<16x32xf32>
    %cst_94 = arith.constant 1.000000e+00 : f32
    %119 = vector.broadcast %cst_94 : f32 to vector<16x32xf32>
    %120 = arith.addf %119, %118 : vector<16x32xf32>
    %121 = arith.divf %119, %120 : vector<16x32xf32>
    %122 = arith.addf %87, %108 : vector<16x32xf32>
    %123 = arith.negf %122 : vector<16x32xf32>
    %124 = math.exp %123 : vector<16x32xf32>
    %cst_95 = arith.constant 1.000000e+00 : f32
    %125 = vector.broadcast %cst_95 : f32 to vector<16x32xf32>
    %126 = arith.addf %125, %124 : vector<16x32xf32>
    %127 = arith.divf %125, %126 : vector<16x32xf32>
    %128 = arith.mulf %121, %115 : vector<16x32xf32>
    %129 = arith.addf %94, %128 : vector<16x32xf32>
    %130 = math.tanh %129 : vector<16x32xf32>
    %cst_96 = arith.constant 1.000000e+00 : f32
    %131 = vector.broadcast %cst_96 : f32 to vector<16x32xf32>
    %132 = arith.subf %131, %127 : vector<16x32xf32>
    %133 = arith.mulf %132, %130 : vector<16x32xf32>
    %134 = arith.mulf %127, %71 : vector<16x32xf32>
    %135 = arith.addf %133, %134 : vector<16x32xf32>
    %c1_97 = arith.constant 1 : index
    %c0_98 = arith.constant 0 : index
    %c0_99 = arith.constant 0 : index
    %136 = vector.load %arg16[%c1_97, %c0_98, %c0_99] : memref<2x16x32xf32, #tpu.memory_space<vmem>>, vector<1x16x32xf32>
    %137 = vector.shape_cast %136 : vector<1x16x32xf32> to vector<16x32xf32>
    %138 = vector.shape_cast %135 : vector<16x32xf32> to vector<1x16x32xf32>
    tpu.vector_store %arg16[%c1_97, %c0_98, %c0_99], %138 {strides = array<i32>} : memref<2x16x32xf32, #tpu.memory_space<vmem>>, vector<1x16x32xf32>,
    %139 = arith.truncf %135 : vector<16x32xf32> to vector<16x32xbf16>
    %c0_100 = arith.constant 0 : index
    %c0_101 = arith.constant 0 : index
    %140 = vector.load %arg12[%c0_100, %c0_101] : memref<32x32xbf16, #tpu.memory_space<vmem>>, vector<32x32xbf16>
    %cst_102 = arith.constant dense<0.000000e+00> : vector<16x32xf32>
    %141 = tpu.matmul %139, %140, %cst_102 {dimension_numbers = #tpu.dot_dimension_numbers<[1], [0], [0], [1], [0, 0, 1, 1], [], []>} : vector<16x32xbf16>, vector<32x32xbf16>, vector<16x32xf32> -> vector<16x32xf32>
    %c0_103 = arith.constant 0 : index
    %c0_104 = arith.constant 0 : index
    %c0_105 = arith.constant 0 : index
    %142 = vector.load %arg3[%c0_103, %c0_104, %c0_105] : memref<16x8x32xbf16, #tpu.memory_space<vmem>>, vector<16x8x32xbf16>
    %143 = arith.extf %142 : vector<16x8x32xbf16> to vector<16x8x32xf32>
    %144 = vector.shape_cast %141 : vector<16x32xf32> to vector<16x1x32xf32>
    %145 = vector.broadcast %144 : vector<16x1x32xf32> to vector<16x8x32xf32>
    %146 = arith.mulf %143, %145 : vector<16x8x32xf32>
    %cst_106 = arith.constant dense<0.000000e+00> : vector<16x8xf32>
    %147 = vector.multi_reduction <add>, %146, %cst_106 [2] : vector<16x8x32xf32> to vector<16x8xf32>
    %cst_107 = arith.constant dense<0xFF800000> : vector<16xf32>
    %148 = vector.multi_reduction <maximumf>, %147, %cst_107 [1] : vector<16x8xf32> to vector<16xf32>
    %149 = vector.shape_cast %148 : vector<16xf32> to vector<16x1xf32>
    %150 = vector.broadcast %149 : vector<16x1xf32> to vector<16x8xf32>
    %151 = arith.subf %147, %150 : vector<16x8xf32>
    %152 = math.exp %151 : vector<16x8xf32>
    %cst_108 = arith.constant dense<0.000000e+00> : vector<16xf32>
    %153 = vector.multi_reduction <add>, %152, %cst_108 [1] : vector<16x8xf32> to vector<16xf32>
    %154 = vector.shape_cast %153 : vector<16xf32> to vector<16x1xf32>
    %155 = vector.broadcast %154 : vector<16x1xf32> to vector<16x8xf32>
    %156 = arith.divf %152, %155 : vector<16x8xf32>
    %157 = vector.shape_cast %156 : vector<16x8xf32> to vector<16x8x1xf32>
    %158 = vector.broadcast %157 : vector<16x8x1xf32> to vector<16x8x32xf32>
    %159 = arith.mulf %158, %143 : vector<16x8x32xf32>
    %cst_109 = arith.constant dense<0.000000e+00> : vector<16x32xf32>
    %160 = vector.multi_reduction <add>, %159, %cst_109 [1] : vector<16x8x32xf32> to vector<16x32xf32>
    %c0_110 = arith.constant 0 : index
    %c0_111 = arith.constant 0 : index
    %c0_112 = arith.constant 0 : index
    %161 = vector.load %arg17[%c0_110, %c0_111, %c0_112] : memref<1x16x32xf32, #tpu.memory_space<vmem>>, vector<1x16x32xf32>
    %162 = vector.shape_cast %161 : vector<1x16x32xf32> to vector<16x32xf32>
    %163 = vector.shape_cast %160 : vector<16x32xf32> to vector<1x16x32xf32>
    tpu.vector_store %arg17[%c0_110, %c0_111, %c0_112], %163 {strides = array<i32>} : memref<1x16x32xf32, #tpu.memory_space<vmem>>, vector<1x16x32xf32>,
    %164 = arith.truncf %135 : vector<16x32xf32> to vector<16x32xbf16>
    %c0_113 = arith.constant 0 : index
    %c0_114 = arith.constant 0 : index
    %165 = vector.load %arg13[%c0_113, %c0_114] : memref<32x32xbf16, #tpu.memory_space<vmem>>, vector<32x32xbf16>
    %cst_115 = arith.constant dense<0.000000e+00> : vector<16x32xf32>
    %166 = tpu.matmul %164, %165, %cst_115 {dimension_numbers = #tpu.dot_dimension_numbers<[1], [0], [0], [1], [0, 0, 1, 1], [], []>} : vector<16x32xbf16>, vector<32x32xbf16>, vector<16x32xf32> -> vector<16x32xf32>
    %167 = arith.truncf %160 : vector<16x32xf32> to vector<16x32xbf16>
    %c0_116 = arith.constant 0 : index
    %c0_117 = arith.constant 0 : index
    %168 = vector.load %arg14[%c0_116, %c0_117] : memref<32x32xbf16, #tpu.memory_space<vmem>>, vector<32x32xbf16>
    %cst_118 = arith.constant dense<0.000000e+00> : vector<16x32xf32>
    %169 = tpu.matmul %167, %168, %cst_118 {dimension_numbers = #tpu.dot_dimension_numbers<[1], [0], [0], [1], [0, 0, 1, 1], [], []>} : vector<16x32xbf16>, vector<32x32xbf16>, vector<16x32xf32> -> vector<16x32xf32>
    %170 = arith.addf %166, %169 : vector<16x32xf32>
    %c0_119 = arith.constant 0 : index
    %c0_120 = arith.constant 0 : index
    %171 = vector.load %arg15[%c0_119, %c0_120] : memref<1x32xf32, #tpu.memory_space<vmem>>, vector<1x32xf32>
    %172 = vector.broadcast %171 : vector<1x32xf32> to vector<16x32xf32>
    %173 = arith.addf %170, %172 : vector<16x32xf32>
    %174 = math.tanh %173 : vector<16x32xf32>
    %175 = arith.truncf %174 : vector<16x32xf32> to vector<16x32xbf16>
    %c0_121 = arith.constant 0 : index
    %c0_122 = arith.constant 0 : index
    %176 = vector.load %arg18[%c0_121, %c0_122] : memref<16x32xbf16, #tpu.memory_space<vmem>>, vector<16x32xbf16>
    tpu.vector_store %arg18[%c0_121, %c0_122], %175 {strides = array<i32>} : memref<16x32xbf16, #tpu.memory_space<vmem>>, vector<16x32xbf16>,
    return
  }
  func.func @transform_0(%arg0: i32) -> (i32, i32) {
    %c0_i32 = arith.constant 0 : i32
    %c0_i32_0 = arith.constant 0 : i32
    %c0_i32_1 = arith.constant 0 : i32
    return %c0_i32, %c0_i32_0 : i32, i32
  }
  func.func @transform_1(%arg0: i32) -> (i32, i32, i32) {
    %c0_i32 = arith.constant 0 : i32
    %c0_i32_0 = arith.constant 0 : i32
    %c0_i32_1 = arith.constant 0 : i32
    %c0_i32_2 = arith.constant 0 : i32
    return %c0_i32, %c0_i32_0, %c0_i32_1 : i32, i32, i32
  }
  func.func @transform_2(%arg0: i32) -> (i32, i32, i32) {
    %c0_i32 = arith.constant 0 : i32
    %c0_i32_0 = arith.constant 0 : i32
    %c0_i32_1 = arith.constant 0 : i32
    %c0_i32_2 = arith.constant 0 : i32
    return %c0_i32, %c0_i32_0, %c0_i32_1 : i32, i32, i32
  }
  func.func @transform_3(%arg0: i32) -> (i32, i32, i32) {
    %c0_i32 = arith.constant 0 : i32
    %c0_i32_0 = arith.constant 0 : i32
    %c0_i32_1 = arith.constant 0 : i32
    %c0_i32_2 = arith.constant 0 : i32
    return %c0_i32, %c0_i32_0, %c0_i32_1 : i32, i32, i32
  }
  func.func @transform_4(%arg0: i32) -> (i32, i32, i32) {
    %c0_i32 = arith.constant 0 : i32
    %c0_i32_0 = arith.constant 0 : i32
    %c0_i32_1 = arith.constant 0 : i32
    %c0_i32_2 = arith.constant 0 : i32
    return %c0_i32, %c0_i32_0, %c0_i32_1 : i32, i32, i32
  }
  func.func @transform_5(%arg0: i32) -> (i32, i32, i32) {
    %c0_i32 = arith.constant 0 : i32
    %c0_i32_0 = arith.constant 0 : i32
    %c0_i32_1 = arith.constant 0 : i32
    %c0_i32_2 = arith.constant 0 : i32
    return %c0_i32, %c0_i32_0, %c0_i32_1 : i32, i32, i32
  }
  func.func @transform_6(%arg0: i32) -> (i32, i32, i32) {
    %c0_i32 = arith.constant 0 : i32
    %c0_i32_0 = arith.constant 0 : i32
    %c0_i32_1 = arith.constant 0 : i32
    %c0_i32_2 = arith.constant 0 : i32
    return %c0_i32, %c0_i32_0, %c0_i32_1 : i32, i32, i32
  }
  func.func @transform_7(%arg0: i32) -> (i32, i32, i32) {
    %c0_i32 = arith.constant 0 : i32
    %c0_i32_0 = arith.constant 0 : i32
    %c0_i32_1 = arith.constant 0 : i32
    %c0_i32_2 = arith.constant 0 : i32
    return %c0_i32, %c0_i32_0, %c0_i32_1 : i32, i32, i32
  }
  func.func @transform_8(%arg0: i32) -> (i32, i32, i32) {
    %c0_i32 = arith.constant 0 : i32
    %c0_i32_0 = arith.constant 0 : i32
    %c0_i32_1 = arith.constant 0 : i32
    %c0_i32_2 = arith.constant 0 : i32
    return %c0_i32, %c0_i32_0, %c0_i32_1 : i32, i32, i32
  }
  func.func @transform_9(%arg0: i32) -> (i32, i32, i32) {
    %c0_i32 = arith.constant 0 : i32
    %c0_i32_0 = arith.constant 0 : i32
    %c0_i32_1 = arith.constant 0 : i32
    %c0_i32_2 = arith.constant 0 : i32
    return %c0_i32, %c0_i32_0, %c0_i32_1 : i32, i32, i32
  }
  func.func @transform_10(%arg0: i32) -> (i32, i32, i32) {
    %c0_i32 = arith.constant 0 : i32
    %c0_i32_0 = arith.constant 0 : i32
    %c0_i32_1 = arith.constant 0 : i32
    %c0_i32_2 = arith.constant 0 : i32
    return %c0_i32, %c0_i32_0, %c0_i32_1 : i32, i32, i32
  }
  func.func @transform_11(%arg0: i32) -> (i32, i32) {
    %c0_i32 = arith.constant 0 : i32
    %c0_i32_0 = arith.constant 0 : i32
    %c0_i32_1 = arith.constant 0 : i32
    return %c0_i32, %c0_i32_0 : i32, i32
  }
  func.func @transform_12(%arg0: i32) -> (i32, i32) {
    %c0_i32 = arith.constant 0 : i32
    %c0_i32_0 = arith.constant 0 : i32
    %c0_i32_1 = arith.constant 0 : i32
    return %c0_i32, %c0_i32_0 : i32, i32
  }
  func.func @transform_13(%arg0: i32) -> (i32, i32) {
    %c0_i32 = arith.constant 0 : i32
    %c0_i32_0 = arith.constant 0 : i32
    %c0_i32_1 = arith.constant 0 : i32
    return %c0_i32, %c0_i32_0 : i32, i32
  }
  func.func @transform_14(%arg0: i32) -> (i32, i32) {
    %c0_i32 = arith.constant 0 : i32
    %c0_i32_0 = arith.constant 0 : i32
    %c0_i32_1 = arith.constant 0 : i32
    return %c0_i32, %c0_i32_0 : i32, i32
  }
  func.func @transform_15(%arg0: i32) -> (i32, i32, i32) {
    %c0_i32 = arith.constant 0 : i32
    %c0_i32_0 = arith.constant 0 : i32
    %c0_i32_1 = arith.constant 0 : i32
    %c0_i32_2 = arith.constant 0 : i32
    return %c0_i32, %c0_i32_0, %c0_i32_1 : i32, i32, i32
  }
  func.func @transform_16(%arg0: i32) -> (i32, i32, i32) {
    %c0_i32 = arith.constant 0 : i32
    %c0_i32_0 = arith.constant 0 : i32
    %c0_i32_1 = arith.constant 0 : i32
    %c0_i32_2 = arith.constant 0 : i32
    return %c0_i32, %c0_i32_0, %c0_i32_1 : i32, i32, i32
  }
  func.func @transform_17(%arg0: i32) -> (i32, i32) {
    %c0_i32 = arith.constant 0 : i32
    %c0_i32_0 = arith.constant 0 : i32
    %c0_i32_1 = arith.constant 0 : i32
    return %c0_i32, %c0_i32_0 : i32, i32
  }
}

</mosaic_0001>

<llo_original>
// kernel: attent_gru_decoder_forward.3
$region0: #{attent_gru_decoder_forward.3}
  #allocation0 [shape = 'u32[]', space=smem, size = 0x4, offset = 0x4, fixed_abs, tag = 'smem constant byte address 0x4 - core index']
  #allocation1 [shape = 'u32[144,128]{1,0:T(1,128)}', space=vmem, size = 0x12000, scoped, tag = 'internal scratch']
  %s0 = inlined_call_operand.vmem [shape: bf16[16,32], index: 0, kind: input, shape index: {}]
  %s1 = inlined_call_operand.vmem [shape: bf16[32,64], index: 1, kind: input, shape index: {}]
  %s2 = inlined_call_operand.vmem [shape: f32[1,64], index: 2, kind: input, shape index: {}]
  %s3 = inlined_call_operand.vmem [shape: f32[16,64], index: 3, kind: output, shape index: {0}]
  %s4 = inlined_call_operand.vmem [shape: f32[1,16,1], index: 4, kind: output, shape index: {1}]
  %s5 = inlined_call_operand.vmem [shape: f32[1,16,1], index: 5, kind: output, shape index: {2}]
  %6 = xla_tuple %s3, %s4, %s5
  %s7 = sld [smem:[#allocation0]]
  $region38: #{attent_gru_decoder_forward.3} parent=0
    _
  %s9 = ssub.s32 1, %s7
  %s10 = scalar_select 0, %s9, %s7
  // Predicated region
  $region2: #{attent_gru_decoder_forward.3} parent=0 // pred_check
    _
  $region3: #{attent_gru_decoder_forward.3} parent=0 // pred_check_branch
    %12 = sbr.rel (0) target = $region5
  $region4: #{attent_gru_decoder_forward.3} parent=0 // pred_region
    _
  $region5: #{attent_gru_decoder_forward.3} parent=0 // pred_fallthru
    _
  // Predicated region
  $region6: #{attent_gru_decoder_forward.3} parent=0 // pred_check
    _
  $region7: #{attent_gru_decoder_forward.3} parent=0 // pred_check_branch
    %14 = sbr.rel (0) target = $region9
  $region8: #{attent_gru_decoder_forward.3} parent=0 // pred_region
    _
  $region9: #{attent_gru_decoder_forward.3} parent=0 // pred_fallthru
    _
  // Predicated region
  $region10: #{attent_gru_decoder_forward.3} parent=0 // pred_check
    _
  $region11: #{attent_gru_decoder_forward.3} parent=0 // pred_check_branch
    %16 = sbr.rel (0) target = $region13
  $region12: #{attent_gru_decoder_forward.3} parent=0 // pred_region
    _
  $region13: #{attent_gru_decoder_forward.3} parent=0 // pred_fallthru
    _
  %v18 = vld [vmem:[%s0] sm:$0xf]
  %v19 = vld [vmem:[%s0 + $0x4] sm:$0xf]
  %v20 = vld [vmem:[%s1] sm:$0xf]
  %v21 = vld [vmem:[%s1 + $0x4] sm:$0xf]
  %v22 = vld [vmem:[%s1 + $0x8] sm:$0xf]
  %v23 = vld [vmem:[%s1 + $0xc] sm:$0xf]
  %v24 = vld [vmem:[%s2] sm:$0x1]
  %v26 = vlaneseq
  %v27 = vshrl.u32 %v26, 7
  %v28 = vsub.s32 0, %v27
  %v29 = vrot.slane %v24, %v28
  %v33 = vunpack.c.l.b16 %v18
  %v34 = vunpack.c.l.b16 %v19
  %v35 = vpack.c.b16 %v34, %v33
  %v40 = vunpack.c.l.b16 %v20
  %v41 = vunpack.c.l.b16 %v21
  %v42 = vunpack.c.l.b16 %v22
  %v43 = vunpack.c.l.b16 %v23
  %v44 = vpack.c.b16 %v41, %v40
  %v45 = vpack.c.b16 %v43, %v42
  %vm48 = vcmask 261120
  %v50 = vsel %vm48, %v35, 0
  %52 = vmatprep.subr.bf16.mxu0 0
  %53 = vmatpush1.bf16.msra.mxu0 0
  %54 = vmatprep.subr.bf16.mxu0 0
  %55 = vmatpush1.bf16.msra.mxu0 0
  %56 = vmatprep.subr.bf16.mxu0 0
  %57 = vmatpush1.bf16.msra.mxu0 0
  %58 = vmatprep.subr.bf16.mxu0 0
  %59 = vmatpush1.bf16.msra.mxu0 0
  %60 = vmatprep.subr.bf16.mxu0 0
  %61 = vmatpush1.bf16.msra.mxu0 0
  %62 = vmatprep.subr.bf16.mxu0 0
  %63 = vmatpush1.bf16.msra.mxu0 0
  %64 = vmatprep.subr.bf16.mxu0 0
  %65 = vmatpush1.bf16.msra.mxu0 %v45
  %66 = vmatprep.subr.bf16.mxu0 0
  %67 = vmatpush1.bf16.msra.mxu0 %v44
  %68 = vmatprep.subr.bf16.mxu0 0
  %69 = vmatpush2.bf16.msra.mxu0 0
  %70 = vmatprep.subr.bf16.mxu0 0
  %71 = vmatpush2.bf16.msra.mxu0 0
  %72 = vmatprep.subr.bf16.mxu0 0
  %73 = vmatpush2.bf16.msra.mxu0 0
  %74 = vmatprep.subr.bf16.mxu0 0
  %75 = vmatpush2.bf16.msra.mxu0 0
  %76 = vmatprep.subr.bf16.mxu0 0
  %77 = vmatpush2.bf16.msra.mxu0 0
  %78 = vmatprep.subr.bf16.mxu0 0
  %79 = vmatpush2.bf16.msra.mxu0 0
  %80 = vmatprep.subr.bf16.mxu0 0
  %81 = vmatpush2.bf16.msra.mxu0 0
  %82 = vmatprep.subr.bf16.mxu0 0
  %83 = vmatpush2.bf16.msra.mxu0 0
  %84 = vmatprep.mubr.bf16.mxu0 0
  %85 = vmatmul.mubr.bf16.gmra.mxu0 %v50
  %v86 = vpop.f32.mrf.mxu0
  %v87 = vadd.f32 %v29, %v86
  %v88 = vpop.f32.mrf.mxu0
  %v89 = vpop.f32.mrf.mxu0
  %v90 = vadd.f32 %v29, %v89
  %v91 = vpop.f32.mrf.mxu0
  %92 = vdwg.mxu0
  %vm93 = vcmask 523264
  %94 = vst.msk [vmem:[%s3] sm:$0xff] %vm93, %v87
  %95 = vst.msk [vmem:[%s3 + $0x8] sm:$0xff] %vm93, %v90
  %v96 = vsel %vm93, %v87, -inf
  %97 = vmax.xlane.f32.xlu0 %v96
  %v98 = vpop.xlane.xlu0 %97
  %v99 = vsel %vm93, %v90, -inf
  %100 = vmax.xlane.f32.xlu0 %v99
  %v101 = vpop.xlane.xlu0 %100
  %v102 = vsub.f32 %v87, %v98
  %v103 = vsub.f32 %v90, %v101
  %v104 = vmul.f32 %v102, 1.442695
  %v105 = vpow.pop %v104
  %v106 = vmul.f32 %v103, 1.442695
  %v107 = vpow.pop %v106
  %v108 = vsel %vm93, %v105, 0.0
  %109 = vadd.xlane.f32.xlu0 %v108
  %v110 = vpop.xlane.xlu0 %109
  %v111 = vsel %vm93, %v107, 0.0
  %112 = vadd.xlane.f32.xlu0 %v111
  %v113 = vpop.xlane.xlu0 %112
  %vm114 = vcmask 7168
  %115 = vst.msk [vmem:[%s4] sm:$0xff] %vm114, %v98
  %116 = vst.msk [vmem:[%s4 + $0x8] sm:$0xff] %vm114, %v101
  %117 = vst.msk [vmem:[%s5] sm:$0xff] %vm114, %v110
  %118 = vst.msk [vmem:[%s5 + $0x8] sm:$0xff] %vm114, %v113
  // Predicated region
  $region14: #{attent_gru_decoder_forward.3} parent=0 // pred_check
    _
  $region15: #{attent_gru_decoder_forward.3} parent=0 // pred_check_branch
    %120 = sbr.rel (0) target = $region17
  $region16: #{attent_gru_decoder_forward.3} parent=0 // pred_region
    _
  $region17: #{attent_gru_decoder_forward.3} parent=0 // pred_fallthru
    _
  // Predicated region
  $region18: #{attent_gru_decoder_forward.3} parent=0 // pred_check
    _
  $region19: #{attent_gru_decoder_forward.3} parent=0 // pred_check_branch
    %122 = sbr.rel (0) target = $region21
  $region20: #{attent_gru_decoder_forward.3} parent=0 // pred_region
    _
  $region21: #{attent_gru_decoder_forward.3} parent=0 // pred_fallthru
    _
  // Predicated region
  $region22: #{attent_gru_decoder_forward.3} parent=0 // pred_check
    _
  $region23: #{attent_gru_decoder_forward.3} parent=0 // pred_check_branch
    %124 = sbr.rel (0) target = $region25
  $region24: #{attent_gru_decoder_forward.3} parent=0 // pred_region
    _
  $region25: #{attent_gru_decoder_forward.3} parent=0 // pred_fallthru
    _
  // Predicated region
  $region26: #{attent_gru_decoder_forward.3} parent=0 // pred_check
    _
  $region27: #{attent_gru_decoder_forward.3} parent=0 // pred_check_branch
    %126 = sbr.rel (0) target = $region29
  $region28: #{attent_gru_decoder_forward.3} parent=0 // pred_region
    _
  $region29: #{attent_gru_decoder_forward.3} parent=0 // pred_fallthru
    _
  // Predicated region
  $region30: #{attent_gru_decoder_forward.3} parent=0 // pred_check
    _
  $region31: #{attent_gru_decoder_forward.3} parent=0 // pred_check_branch
    %128 = sbr.rel (0) target = $region33
  $region32: #{attent_gru_decoder_forward.3} parent=0 // pred_region
    _
  $region33: #{attent_gru_decoder_forward.3} parent=0 // pred_fallthru
    _
  // Predicated region
  $region34: #{attent_gru_decoder_forward.3} parent=0 // pred_check
    _
  $region35: #{attent_gru_decoder_forward.3} parent=0 // pred_check_branch
    %130 = sbr.rel (0) target = $region37
  $region36: #{attent_gru_decoder_forward.3} parent=0 // pred_region
    _
  $region37: #{attent_gru_decoder_forward.3} parent=0 // pred_fallthru
    _

// kernel: attent_gru_decoder_forward.2
$region0: #{attent_gru_decoder_forward.2}
  #allocation0 [shape = 'u32[]', space=smem, size = 0x4, offset = 0x4, fixed_abs, tag = 'smem constant byte address 0x4 - core index']
  #allocation1 [shape = 'u32[144,128]{1,0:T(1,128)}', space=vmem, size = 0x12000, scoped, tag = 'internal scratch']
  %s0 = inlined_call_operand.vmem [shape: f32[16,16], index: 0, kind: input, shape index: {}]
  %s1 = inlined_call_operand.vmem [shape: f32[2,16,32], index: 1, kind: input, shape index: {}, may-alias: {1,15}]
  %s2 = inlined_call_operand.vmem [shape: bf16[16,8,32], index: 2, kind: input, shape index: {}]
  %s3 = inlined_call_operand.vmem [shape: bf16[3,16,32], index: 3, kind: input, shape index: {}]
  %s4 = inlined_call_operand.vmem [shape: bf16[3,32,32], index: 4, kind: input, shape index: {}]
  %s5 = inlined_call_operand.vmem [shape: f32[3,1,32], index: 5, kind: input, shape index: {}]
  %s6 = inlined_call_operand.vmem [shape: f32[3,1,32], index: 6, kind: input, shape index: {}]
  %s7 = inlined_call_operand.vmem [shape: bf16[3,32,32], index: 7, kind: input, shape index: {}]
  %s8 = inlined_call_operand.vmem [shape: bf16[3,32,32], index: 8, kind: input, shape index: {}]
  %s9 = inlined_call_operand.vmem [shape: f32[3,1,32], index: 9, kind: input, shape index: {}]
  %s10 = inlined_call_operand.vmem [shape: f32[3,1,32], index: 10, kind: input, shape index: {}]
  %s11 = inlined_call_operand.vmem [shape: bf16[32,32], index: 11, kind: input, shape index: {}]
  %s12 = inlined_call_operand.vmem [shape: bf16[32,32], index: 12, kind: input, shape index: {}]
  %s13 = inlined_call_operand.vmem [shape: bf16[32,32], index: 13, kind: input, shape index: {}]
  %s14 = inlined_call_operand.vmem [shape: f32[1,32], index: 14, kind: input, shape index: {}]
  %s15 = inlined_call_operand.vmem [shape: f32[2,16,32], index: 15, kind: output, shape index: {0}, may-alias: {1,15}]
  %s16 = inlined_call_operand.vmem [shape: f32[1,16,32], index: 16, kind: output, shape index: {1}]
  %s17 = inlined_call_operand.vmem [shape: bf16[16,32], index: 17, kind: output, shape index: {2}]
  %18 = xla_tuple %s15, %s16, %s17
  %s19 = sld [smem:[#allocation0]]
  $region86: #{attent_gru_decoder_forward.2} parent=0
    _
  %s21 = ssub.s32 1, %s19
  %s22 = scalar_select 0, %s21, %s19
  // Predicated region
  $region2: #{attent_gru_decoder_forward.2} parent=0 // pred_check
    _
  $region3: #{attent_gru_decoder_forward.2} parent=0 // pred_check_branch
    %24 = sbr.rel (0) target = $region5
  $region4: #{attent_gru_decoder_forward.2} parent=0 // pred_region
    _
  $region5: #{attent_gru_decoder_forward.2} parent=0 // pred_fallthru
    _
  // Predicated region
  $region6: #{attent_gru_decoder_forward.2} parent=0 // pred_check
    _
  $region7: #{attent_gru_decoder_forward.2} parent=0 // pred_check_branch
    %26 = sbr.rel (0) target = $region9
  $region8: #{attent_gru_decoder_forward.2} parent=0 // pred_region
    _
  $region9: #{attent_gru_decoder_forward.2} parent=0 // pred_fallthru
    _
  // Predicated region
  $region10: #{attent_gru_decoder_forward.2} parent=0 // pred_check
    _
  $region11: #{attent_gru_decoder_forward.2} parent=0 // pred_check_branch
    %28 = sbr.rel (0) target = $region13
  $region12: #{attent_gru_decoder_forward.2} parent=0 // pred_region
    _
  $region13: #{attent_gru_decoder_forward.2} parent=0 // pred_fallthru
    _
  // Predicated region
  $region14: #{attent_gru_decoder_forward.2} parent=0 // pred_check
    _
  $region15: #{attent_gru_decoder_forward.2} parent=0 // pred_check_branch
    %30 = sbr.rel (0) target = $region17
  $region16: #{attent_gru_decoder_forward.2} parent=0 // pred_region
    _
  $region17: #{attent_gru_decoder_forward.2} parent=0 // pred_fallthru
    _
  // Predicated region
  $region18: #{attent_gru_decoder_forward.2} parent=0 // pred_check
    _
  $region19: #{attent_gru_decoder_forward.2} parent=0 // pred_check_branch
    %32 = sbr.rel (0) target = $region21
  $region20: #{attent_gru_decoder_forward.2} parent=0 // pred_region
    _
  $region21: #{attent_gru_decoder_forward.2} parent=0 // pred_fallthru
    _
  // Predicated region
  $region22: #{attent_gru_decoder_forward.2} parent=0 // pred_check
    _
  $region23: #{attent_gru_decoder_forward.2} parent=0 // pred_check_branch
    %34 = sbr.rel (0) target = $region25
  $region24: #{attent_gru_decoder_forward.2} parent=0 // pred_region
    _
  $region25: #{attent_gru_decoder_forward.2} parent=0 // pred_fallthru
    _
  // Predicated region
  $region26: #{attent_gru_decoder_forward.2} parent=0 // pred_check
    _
  $region27: #{attent_gru_decoder_forward.2} parent=0 // pred_check_branch
    %36 = sbr.rel (0) target = $region29
  $region28: #{attent_gru_decoder_forward.2} parent=0 // pred_region
    _
  $region29: #{attent_gru_decoder_forward.2} parent=0 // pred_fallthru
    _
  // Predicated region
  $region30: #{attent_gru_decoder_forward.2} parent=0 // pred_check
    _
  $region31: #{attent_gru_decoder_forward.2} parent=0 // pred_check_branch
    %38 = sbr.rel (0) target = $region33
  $region32: #{attent_gru_decoder_forward.2} parent=0 // pred_region
    _
  $region33: #{attent_gru_decoder_forward.2} parent=0 // pred_fallthru
    _
  // Predicated region
  $region34: #{attent_gru_decoder_forward.2} parent=0 // pred_check
    _
  $region35: #{attent_gru_decoder_forward.2} parent=0 // pred_check_branch
    %40 = sbr.rel (0) target = $region37
  $region36: #{attent_gru_decoder_forward.2} parent=0 // pred_region
    _
  $region37: #{attent_gru_decoder_forward.2} parent=0 // pred_fallthru
    _
  // Predicated region
  $region38: #{attent_gru_decoder_forward.2} parent=0 // pred_check
    _
  $region39: #{attent_gru_decoder_forward.2} parent=0 // pred_check_branch
    %42 = sbr.rel (0) target = $region41
  $region40: #{attent_gru_decoder_forward.2} parent=0 // pred_region
    _
  $region41: #{attent_gru_decoder_forward.2} parent=0 // pred_fallthru
    _
  // Predicated region
  $region42: #{attent_gru_decoder_forward.2} parent=0 // pred_check
    _
  $region43: #{attent_gru_decoder_forward.2} parent=0 // pred_check_branch
    %44 = sbr.rel (0) target = $region45
  $region44: #{attent_gru_decoder_forward.2} parent=0 // pred_region
    _
  $region45: #{attent_gru_decoder_forward.2} parent=0 // pred_fallthru
    _
  // Predicated region
  $region46: #{attent_gru_decoder_forward.2} parent=0 // pred_check
    _
  $region47: #{attent_gru_decoder_forward.2} parent=0 // pred_check_branch
    %46 = sbr.rel (0) target = $region49
  $region48: #{attent_gru_decoder_forward.2} parent=0 // pred_region
    _
  $region49: #{attent_gru_decoder_forward.2} parent=0 // pred_fallthru
    _
  // Predicated region
  $region50: #{attent_gru_decoder_forward.2} parent=0 // pred_check
    _
  $region51: #{attent_gru_decoder_forward.2} parent=0 // pred_check_branch
    %48 = sbr.rel (0) target = $region53
  $region52: #{attent_gru_decoder_forward.2} parent=0 // pred_region
    _
  $region53: #{attent_gru_decoder_forward.2} parent=0 // pred_fallthru
    _
  // Predicated region
  $region54: #{attent_gru_decoder_forward.2} parent=0 // pred_check
    _
  $region55: #{attent_gru_decoder_forward.2} parent=0 // pred_check_branch
    %50 = sbr.rel (0) target = $region57
  $region56: #{attent_gru_decoder_forward.2} parent=0 // pred_region
    _
  $region57: #{attent_gru_decoder_forward.2} parent=0 // pred_fallthru
    _
  // Predicated region
  $region58: #{attent_gru_decoder_forward.2} parent=0 // pred_check
    _
  $region59: #{attent_gru_decoder_forward.2} parent=0 // pred_check_branch
    %52 = sbr.rel (0) target = $region61
  $region60: #{attent_gru_decoder_forward.2} parent=0 // pred_region
    _
  $region61: #{attent_gru_decoder_forward.2} parent=0 // pred_fallthru
    _
  %v54 = vld [vmem:[%s0] sm:$0xff]
  %v55 = vld [vmem:[%s0 + $0x8] sm:$0xff]
  %v56 = vld [vmem:[%s1] sm:$0xff]
  %v57 = vld [vmem:[%s1 + $0x8] sm:$0xff]
  %v58 = vpack.c.bf16 %v55, %v54
  %v59 = vpack.c.bf16 %v57, %v56
  %v60 = vld [vmem:[%s3] sm:$0xf]
  %v61 = vld [vmem:[%s3 + $0x4] sm:$0xf]
  %v62 = vld [vmem:[%s5] sm:$0x1]
  %v64 = vlaneseq
  %v65 = vshrl.u32 %v64, 7
  %v66 = vsub.s32 0, %v65
  %v67 = vrot.slane %v62, %v66
  %v71 = vunpack.c.l.b16 %v60
  %v72 = vunpack.c.l.b16 %v61
  %v73 = vpack.c.b16 %v72, %v71
  %vm75 = vcmask 130048
  %v77 = vsel %vm75, %v58, 0
  %79 = vmatprep.subr.bf16.mxu0 0
  %80 = vmatpush1.bf16.msra.mxu0 0
  %81 = vmatprep.subr.bf16.mxu0 0
  %82 = vmatpush1.bf16.msra.mxu0 0
  %83 = vmatprep.subr.bf16.mxu0 0
  %84 = vmatpush1.bf16.msra.mxu0 0
  %85 = vmatprep.subr.bf16.mxu0 0
  %86 = vmatpush1.bf16.msra.mxu0 0
  %87 = vmatprep.subr.bf16.mxu0 0
  %88 = vmatpush1.bf16.msra.mxu0 0
  %89 = vmatprep.subr.bf16.mxu0 0
  %90 = vmatpush1.bf16.msra.mxu0 0
  %91 = vmatprep.subr.bf16.mxu0 0
  %92 = vmatpush1.bf16.msra.mxu0 0
  %93 = vmatprep.subr.bf16.mxu0 0
  %94 = vmatpush1.bf16.msra.mxu0 %v73
  %95 = vmatprep.subr.bf16.mxu0 0
  %96 = vmatpush2.bf16.msra.mxu0 0
  %97 = vmatprep.subr.bf16.mxu0 0
  %98 = vmatpush2.bf16.msra.mxu0 0
  %99 = vmatprep.subr.bf16.mxu0 0
  %100 = vmatpush2.bf16.msra.mxu0 0
  %101 = vmatprep.subr.bf16.mxu0 0
  %102 = vmatpush2.bf16.msra.mxu0 0
  %103 = vmatprep.subr.bf16.mxu0 0
  %104 = vmatpush2.bf16.msra.mxu0 0
  %105 = vmatprep.subr.bf16.mxu0 0
  %106 = vmatpush2.bf16.msra.mxu0 0
  %107 = vmatprep.subr.bf16.mxu0 0
  %108 = vmatpush2.bf16.msra.mxu0 0
  %109 = vmatprep.subr.bf16.mxu0 0
  %110 = vmatpush2.bf16.msra.mxu0 0
  %111 = vmatprep.mubr.bf16.mxu0 0
  %112 = vmatmul.mubr.bf16.gmra.mxu0 %v77
  %v113 = vpop.f32.mrf.mxu0
  %v114 = vadd.f32 %v67, %v113
  %v115 = vpop.f32.mrf.mxu0
  %v116 = vpop.f32.mrf.mxu0
  %v117 = vadd.f32 %v67, %v116
  %v118 = vpop.f32.mrf.mxu0
  %119 = vdwg.mxu0
  %s120 = scalar_lea.vmem %s3, 8
  %v121 = vld [vmem:[%s120] sm:$0xf]
  %v122 = vld [vmem:[%s120 + $0x4] sm:$0xf]
  %s123 = scalar_lea.vmem %s5, 1
  %v124 = vld [vmem:[%s123] sm:$0x1]
  %v126 = vlaneseq
  %v127 = vshrl.u32 %v126, 7
  %v128 = vsub.s32 0, %v127
  %v129 = vrot.slane %v124, %v128
  %v133 = vunpack.c.l.b16 %v121
  %v134 = vunpack.c.l.b16 %v122
  %v135 = vpack.c.b16 %v134, %v133
  %137 = vmatprep.subr.bf16.mxu0 0
  %138 = vmatpush1.bf16.msra.mxu0 0
  %139 = vmatprep.subr.bf16.mxu0 0
  %140 = vmatpush1.bf16.msra.mxu0 0
  %141 = vmatprep.subr.bf16.mxu0 0
  %142 = vmatpush1.bf16.msra.mxu0 0
  %143 = vmatprep.subr.bf16.mxu0 0
  %144 = vmatpush1.bf16.msra.mxu0 0
  %145 = vmatprep.subr.bf16.mxu0 0
  %146 = vmatpush1.bf16.msra.mxu0 0
  %147 = vmatprep.subr.bf16.mxu0 0
  %148 = vmatpush1.bf16.msra.mxu0 0
  %149 = vmatprep.subr.bf16.mxu0 0
  %150 = vmatpush1.bf16.msra.mxu0 0
  %151 = vmatprep.subr.bf16.mxu0 0
  %152 = vmatpush1.bf16.msra.mxu0 %v135
  %153 = vmatprep.subr.bf16.mxu0 0
  %154 = vmatpush2.bf16.msra.mxu0 0
  %155 = vmatprep.subr.bf16.mxu0 0
  %156 = vmatpush2.bf16.msra.mxu0 0
  %157 = vmatprep.subr.bf16.mxu0 0
  %158 = vmatpush2.bf16.msra.mxu0 0
  %159 = vmatprep.subr.bf16.mxu0 0
  %160 = vmatpush2.bf16.msra.mxu0 0
  %161 = vmatprep.subr.bf16.mxu0 0
  %162 = vmatpush2.bf16.msra.mxu0 0
  %163 = vmatprep.subr.bf16.mxu0 0
  %164 = vmatpush2.bf16.msra.mxu0 0
  %165 = vmatprep.subr.bf16.mxu0 0
  %166 = vmatpush2.bf16.msra.mxu0 0
  %167 = vmatprep.subr.bf16.mxu0 0
  %168 = vmatpush2.bf16.msra.mxu0 0
  %169 = vmatprep.mubr.bf16.mxu0 0
  %170 = vmatmul.mubr.bf16.gmra.mxu0 %v77
  %v171 = vpop.f32.mrf.mxu0
  %v172 = vadd.f32 %v129, %v171
  %v173 = vpop.f32.mrf.mxu0
  %v174 = vpop.f32.mrf.mxu0
  %v175 = vadd.f32 %v129, %v174
  %v176 = vpop.f32.mrf.mxu0
  %177 = vdwg.mxu0
  %s178 = scalar_lea.vmem %s3, 16
  %v179 = vld [vmem:[%s178] sm:$0xf]
  %v180 = vld [vmem:[%s178 + $0x4] sm:$0xf]
  %s181 = scalar_lea.vmem %s5, 2
  %v182 = vld [vmem:[%s181] sm:$0x1]
  %v184 = vlaneseq
  %v185 = vshrl.u32 %v184, 7
  %v186 = vsub.s32 0, %v185
  %v187 = vrot.slane %v182, %v186
  %v191 = vunpack.c.l.b16 %v179
  %v192 = vunpack.c.l.b16 %v180
  %v193 = vpack.c.b16 %v192, %v191
  %195 = vmatprep.subr.bf16.mxu0 0
  %196 = vmatpush1.bf16.msra.mxu0 0
  %197 = vmatprep.subr.bf16.mxu0 0
  %198 = vmatpush1.bf16.msra.mxu0 0
  %199 = vmatprep.subr.bf16.mxu0 0
  %200 = vmatpush1.bf16.msra.mxu0 0
  %201 = vmatprep.subr.bf16.mxu0 0
  %202 = vmatpush1.bf16.msra.mxu0 0
  %203 = vmatprep.subr.bf16.mxu0 0
  %204 = vmatpush1.bf16.msra.mxu0 0
  %205 = vmatprep.subr.bf16.mxu0 0
  %206 = vmatpush1.bf16.msra.mxu0 0
  %207 = vmatprep.subr.bf16.mxu0 0
  %208 = vmatpush1.bf16.msra.mxu0 0
  %209 = vmatprep.subr.bf16.mxu0 0
  %210 = vmatpush1.bf16.msra.mxu0 %v193
  %211 = vmatprep.subr.bf16.mxu0 0
  %212 = vmatpush2.bf16.msra.mxu0 0
  %213 = vmatprep.subr.bf16.mxu0 0
  %214 = vmatpush2.bf16.msra.mxu0 0
  %215 = vmatprep.subr.bf16.mxu0 0
  %216 = vmatpush2.bf16.msra.mxu0 0
  %217 = vmatprep.subr.bf16.mxu0 0
  %218 = vmatpush2.bf16.msra.mxu0 0
  %219 = vmatprep.subr.bf16.mxu0 0
  %220 = vmatpush2.bf16.msra.mxu0 0
  %221 = vmatprep.subr.bf16.mxu0 0
  %222 = vmatpush2.bf16.msra.mxu0 0
  %223 = vmatprep.subr.bf16.mxu0 0
  %224 = vmatpush2.bf16.msra.mxu0 0
  %225 = vmatprep.subr.bf16.mxu0 0
  %226 = vmatpush2.bf16.msra.mxu0 0
  %227 = vmatprep.mubr.bf16.mxu0 0
  %228 = vmatmul.mubr.bf16.gmra.mxu0 %v77
  %v229 = vpop.f32.mrf.mxu0
  %v230 = vadd.f32 %v187, %v229
  %v231 = vpop.f32.mrf.mxu0
  %v232 = vpop.f32.mrf.mxu0
  %v233 = vadd.f32 %v187, %v232
  %v234 = vpop.f32.mrf.mxu0
  %235 = vdwg.mxu0
  %v236 = vld [vmem:[%s4] sm:$0xf]
  %v237 = vld [vmem:[%s4 + $0x4] sm:$0xf]
  %v238 = vld [vmem:[%s4 + $0x8] sm:$0xf]
  %v239 = vld [vmem:[%s4 + $0xc] sm:$0xf]
  %v240 = vld [vmem:[%s6] sm:$0x1]
  %v242 = vlaneseq
  %v243 = vshrl.u32 %v242, 7
  %v244 = vsub.s32 0, %v243
  %v245 = vrot.slane %v240, %v244
  %v251 = vunpack.c.l.b16 %v236
  %v252 = vunpack.c.l.b16 %v237
  %v253 = vunpack.c.l.b16 %v238
  %v254 = vunpack.c.l.b16 %v239
  %v255 = vpack.c.b16 %v252, %v251
  %v256 = vpack.c.b16 %v254, %v253
  %vm259 = vcmask 261120
  %v261 = vsel %vm259, %v59, 0
  %263 = vmatprep.subr.bf16.mxu0 0
  %264 = vmatpush1.bf16.msra.mxu0 0
  %265 = vmatprep.subr.bf16.mxu0 0
  %266 = vmatpush1.bf16.msra.mxu0 0
  %267 = vmatprep.subr.bf16.mxu0 0
  %268 = vmatpush1.bf16.msra.mxu0 0
  %269 = vmatprep.subr.bf16.mxu0 0
  %270 = vmatpush1.bf16.msra.mxu0 0
  %271 = vmatprep.subr.bf16.mxu0 0
  %272 = vmatpush1.bf16.msra.mxu0 0
  %273 = vmatprep.subr.bf16.mxu0 0
  %274 = vmatpush1.bf16.msra.mxu0 0
  %275 = vmatprep.subr.bf16.mxu0 0
  %276 = vmatpush1.bf16.msra.mxu0 %v256
  %277 = vmatprep.subr.bf16.mxu0 0
  %278 = vmatpush1.bf16.msra.mxu0 %v255
  %279 = vmatprep.subr.bf16.mxu0 0
  %280 = vmatpush2.bf16.msra.mxu0 0
  %281 = vmatprep.subr.bf16.mxu0 0
  %282 = vmatpush2.bf16.msra.mxu0 0
  %283 = vmatprep.subr.bf16.mxu0 0
  %284 = vmatpush2.bf16.msra.mxu0 0
  %285 = vmatprep.subr.bf16.mxu0 0
  %286 = vmatpush2.bf16.msra.mxu0 0
  %287 = vmatprep.subr.bf16.mxu0 0
  %288 = vmatpush2.bf16.msra.mxu0 0
  %289 = vmatprep.subr.bf16.mxu0 0
  %290 = vmatpush2.bf16.msra.mxu0 0
  %291 = vmatprep.subr.bf16.mxu0 0
  %292 = vmatpush2.bf16.msra.mxu0 0
  %293 = vmatprep.subr.bf16.mxu0 0
  %294 = vmatpush2.bf16.msra.mxu0 0
  %295 = vmatprep.mubr.bf16.mxu0 0
  %296 = vmatmul.mubr.bf16.gmra.mxu0 %v261
  %v297 = vpop.f32.mrf.mxu0
  %v298 = vadd.f32 %v245, %v297
  %v299 = vpop.f32.mrf.mxu0
  %v300 = vpop.f32.mrf.mxu0
  %v301 = vadd.f32 %v245, %v300
  %v302 = vpop.f32.mrf.mxu0
  %303 = vdwg.mxu0
  %s304 = scalar_lea.vmem %s4, 16
  %v305 = vld [vmem:[%s304] sm:$0xf]
  %v306 = vld [vmem:[%s304 + $0x4] sm:$0xf]
  %v307 = vld [vmem:[%s304 + $0x8] sm:$0xf]
  %v308 = vld [vmem:[%s304 + $0xc] sm:$0xf]
  %s309 = scalar_lea.vmem %s6, 1
  %v310 = vld [vmem:[%s309] sm:$0x1]
  %v312 = vlaneseq
  %v313 = vshrl.u32 %v312, 7
  %v314 = vsub.s32 0, %v313
  %v315 = vrot.slane %v310, %v314
  %v321 = vunpack.c.l.b16 %v305
  %v322 = vunpack.c.l.b16 %v306
  %v323 = vunpack.c.l.b16 %v307
  %v324 = vunpack.c.l.b16 %v308
  %v325 = vpack.c.b16 %v322, %v321
  %v326 = vpack.c.b16 %v324, %v323
  %329 = vmatprep.subr.bf16.mxu0 0
  %330 = vmatpush1.bf16.msra.mxu0 0
  %331 = vmatprep.subr.bf16.mxu0 0
  %332 = vmatpush1.bf16.msra.mxu0 0
  %333 = vmatprep.subr.bf16.mxu0 0
  %334 = vmatpush1.bf16.msra.mxu0 0
  %335 = vmatprep.subr.bf16.mxu0 0
  %336 = vmatpush1.bf16.msra.mxu0 0
  %337 = vmatprep.subr.bf16.mxu0 0
  %338 = vmatpush1.bf16.msra.mxu0 0
  %339 = vmatprep.subr.bf16.mxu0 0
  %340 = vmatpush1.bf16.msra.mxu0 0
  %341 = vmatprep.subr.bf16.mxu0 0
  %342 = vmatpush1.bf16.msra.mxu0 %v326
  %343 = vmatprep.subr.bf16.mxu0 0
  %344 = vmatpush1.bf16.msra.mxu0 %v325
  %345 = vmatprep.subr.bf16.mxu0 0
  %346 = vmatpush2.bf16.msra.mxu0 0
  %347 = vmatprep.subr.bf16.mxu0 0
  %348 = vmatpush2.bf16.msra.mxu0 0
  %349 = vmatprep.subr.bf16.mxu0 0
  %350 = vmatpush2.bf16.msra.mxu0 0
  %351 = vmatprep.subr.bf16.mxu0 0
  %352 = vmatpush2.bf16.msra.mxu0 0
  %353 = vmatprep.subr.bf16.mxu0 0
  %354 = vmatpush2.bf16.msra.mxu0 0
  %355 = vmatprep.subr.bf16.mxu0 0
  %356 = vmatpush2.bf16.msra.mxu0 0
  %357 = vmatprep.subr.bf16.mxu0 0
  %358 = vmatpush2.bf16.msra.mxu0 0
  %359 = vmatprep.subr.bf16.mxu0 0
  %360 = vmatpush2.bf16.msra.mxu0 0
  %361 = vmatprep.mubr.bf16.mxu0 0
  %362 = vmatmul.mubr.bf16.gmra.mxu0 %v261
  %v363 = vpop.f32.mrf.mxu0
  %v364 = vadd.f32 %v315, %v363
  %v365 = vpop.f32.mrf.mxu0
  %v366 = vpop.f32.mrf.mxu0
  %v367 = vadd.f32 %v315, %v366
  %v368 = vpop.f32.mrf.mxu0
  %369 = vdwg.mxu0
  %s370 = scalar_lea.vmem %s4, 32
  %v371 = vld [vmem:[%s370] sm:$0xf]
  %v372 = vld [vmem:[%s370 + $0x4] sm:$0xf]
  %v373 = vld [vmem:[%s370 + $0x8] sm:$0xf]
  %v374 = vld [vmem:[%s370 + $0xc] sm:$0xf]
  %s375 = scalar_lea.vmem %s6, 2
  %v376 = vld [vmem:[%s375] sm:$0x1]
  %v378 = vlaneseq
  %v379 = vshrl.u32 %v378, 7
  %v380 = vsub.s32 0, %v379
  %v381 = vrot.slane %v376, %v380
  %v387 = vunpack.c.l.b16 %v371
  %v388 = vunpack.c.l.b16 %v372
  %v389 = vunpack.c.l.b16 %v373
  %v390 = vunpack.c.l.b16 %v374
  %v391 = vpack.c.b16 %v388, %v387
  %v392 = vpack.c.b16 %v390, %v389
  %395 = vmatprep.subr.bf16.mxu0 0
  %396 = vmatpush1.bf16.msra.mxu0 0
  %397 = vmatprep.subr.bf16.mxu0 0
  %398 = vmatpush1.bf16.msra.mxu0 0
  %399 = vmatprep.subr.bf16.mxu0 0
  %400 = vmatpush1.bf16.msra.mxu0 0
  %401 = vmatprep.subr.bf16.mxu0 0
  %402 = vmatpush1.bf16.msra.mxu0 0
  %403 = vmatprep.subr.bf16.mxu0 0
  %404 = vmatpush1.bf16.msra.mxu0 0
  %405 = vmatprep.subr.bf16.mxu0 0
  %406 = vmatpush1.bf16.msra.mxu0 0
  %407 = vmatprep.subr.bf16.mxu0 0
  %408 = vmatpush1.bf16.msra.mxu0 %v392
  %409 = vmatprep.subr.bf16.mxu0 0
  %410 = vmatpush1.bf16.msra.mxu0 %v391
  %411 = vmatprep.subr.bf16.mxu0 0
  %412 = vmatpush2.bf16.msra.mxu0 0
  %413 = vmatprep.subr.bf16.mxu0 0
  %414 = vmatpush2.bf16.msra.mxu0 0
  %415 = vmatprep.subr.bf16.mxu0 0
  %416 = vmatpush2.bf16.msra.mxu0 0
  %417 = vmatprep.subr.bf16.mxu0 0
  %418 = vmatpush2.bf16.msra.mxu0 0
  %419 = vmatprep.subr.bf16.mxu0 0
  %420 = vmatpush2.bf16.msra.mxu0 0
  %421 = vmatprep.subr.bf16.mxu0 0
  %422 = vmatpush2.bf16.msra.mxu0 0
  %423 = vmatprep.subr.bf16.mxu0 0
  %424 = vmatpush2.bf16.msra.mxu0 0
  %425 = vmatprep.subr.bf16.mxu0 0
  %426 = vmatpush2.bf16.msra.mxu0 0
  %427 = vmatprep.mubr.bf16.mxu0 0
  %428 = vmatmul.mubr.bf16.gmra.mxu0 %v261
  %v429 = vpop.f32.mrf.mxu0
  %v430 = vadd.f32 %v381, %v429
  %v431 = vpop.f32.mrf.mxu0
  %v432 = vpop.f32.mrf.mxu0
  %v433 = vadd.f32 %v381, %v432
  %v434 = vpop.f32.mrf.mxu0
  %435 = vdwg.mxu0
  %v436 = vadd.f32 %v114, %v298
  %v437 = vadd.f32 %v117, %v301
  %v438 = vxor.u32 %v436, 2147483648
  %v439 = vxor.u32 %v437, 2147483648
  %v440 = vmul.f32 %v438, 1.442695
  %v441 = vpow.pop %v440
  %v442 = vmul.f32 %v439, 1.442695
  %v443 = vpow.pop %v442
  %v444 = vadd.f32 %v441, 1.0
  %v445 = vadd.f32 %v443, 1.0
  %v446 = vrcp.pop %v444
  %v447 = vmul.f32 1.0, %v446
  %v448 = vrcp.pop %v445
  %v449 = vmul.f32 1.0, %v448
  %v450 = vadd.f32 %v172, %v364
  %v451 = vadd.f32 %v175, %v367
  %v452 = vxor.u32 %v450, 2147483648
  %v453 = vxor.u32 %v451, 2147483648
  %v454 = vmul.f32 %v452, 1.442695
  %v455 = vpow.pop %v454
  %v456 = vmul.f32 %v453, 1.442695
  %v457 = vpow.pop %v456
  %v458 = vadd.f32 %v455, 1.0
  %v459 = vadd.f32 %v457, 1.0
  %v460 = vrcp.pop %v458
  %v461 = vmul.f32 1.0, %v460
  %v462 = vrcp.pop %v459
  %v463 = vmul.f32 1.0, %v462
  %v464 = vmul.f32 %v447, %v430
  %v465 = vmul.f32 %v449, %v433
  %v466 = vadd.f32 %v230, %v464
  %v467 = vadd.f32 %v233, %v465
  %v468 = vtanh.pop %v466
  %v469 = vtanh.pop %v467
  %v470 = vsub.f32 1.0, %v461
  %v471 = vsub.f32 1.0, %v463
  %v472 = vmul.f32 %v470, %v468
  %v473 = vmul.f32 %v471, %v469
  %v474 = vmul.f32 %v461, %v56
  %v475 = vmul.f32 %v463, %v57
  %v476 = vadd.f32 %v472, %v474
  %v477 = vadd.f32 %v473, %v475
  %478 = vst.msk [vmem:[%s15] sm:$0xff] %vm259, %v476
  %479 = vst.msk [vmem:[%s15 + $0x8] sm:$0xff] %vm259, %v477
  %s480 = scalar_lea.vmem %s1, 16
  %v481 = vld [vmem:[%s480] sm:$0xff]
  %v482 = vld [vmem:[%s480 + $0x8] sm:$0xff]
  %v483 = vpack.c.bf16 %v477, %v476
  %v484 = vpack.c.bf16 %v482, %v481
  %v485 = vld [vmem:[%s7] sm:$0xf]
  %v486 = vld [vmem:[%s7 + $0x4] sm:$0xf]
  %v487 = vld [vmem:[%s7 + $0x8] sm:$0xf]
  %v488 = vld [vmem:[%s7 + $0xc] sm:$0xf]
  %v489 = vld [vmem:[%s9] sm:$0x1]
  %v491 = vlaneseq
  %v492 = vshrl.u32 %v491, 7
  %v493 = vsub.s32 0, %v492
  %v494 = vrot.slane %v489, %v493
  %v500 = vunpack.c.l.b16 %v485
  %v501 = vunpack.c.l.b16 %v486
  %v502 = vunpack.c.l.b16 %v487
  %v503 = vunpack.c.l.b16 %v488
  %v504 = vpack.c.b16 %v501, %v500
  %v505 = vpack.c.b16 %v503, %v502
  %v509 = vsel %vm259, %v483, 0
  %511 = vmatprep.subr.bf16.mxu0 0
  %512 = vmatpush1.bf16.msra.mxu0 0
  %513 = vmatprep.subr.bf16.mxu0 0
  %514 = vmatpush1.bf16.msra.mxu0 0
  %515 = vmatprep.subr.bf16.mxu0 0
  %516 = vmatpush1.bf16.msra.mxu0 0
  %517 = vmatprep.subr.bf16.mxu0 0
  %518 = vmatpush1.bf16.msra.mxu0 0
  %519 = vmatprep.subr.bf16.mxu0 0
  %520 = vmatpush1.bf16.msra.mxu0 0
  %521 = vmatprep.subr.bf16.mxu0 0
  %522 = vmatpush1.bf16.msra.mxu0 0
  %523 = vmatprep.subr.bf16.mxu0 0
  %524 = vmatpush1.bf16.msra.mxu0 %v505
  %525 = vmatprep.subr.bf16.mxu0 0
  %526 = vmatpush1.bf16.msra.mxu0 %v504
  %527 = vmatprep.subr.bf16.mxu0 0
  %528 = vmatpush2.bf16.msra.mxu0 0
  %529 = vmatprep.subr.bf16.mxu0 0
  %530 = vmatpush2.bf16.msra.mxu0 0
  %531 = vmatprep.subr.bf16.mxu0 0
  %532 = vmatpush2.bf16.msra.mxu0 0
  %533 = vmatprep.subr.bf16.mxu0 0
  %534 = vmatpush2.bf16.msra.mxu0 0
  %535 = vmatprep.subr.bf16.mxu0 0
  %536 = vmatpush2.bf16.msra.mxu0 0
  %537 = vmatprep.subr.bf16.mxu0 0
  %538 = vmatpush2.bf16.msra.mxu0 0
  %539 = vmatprep.subr.bf16.mxu0 0
  %540 = vmatpush2.bf16.msra.mxu0 0
  %541 = vmatprep.subr.bf16.mxu0 0
  %542 = vmatpush2.bf16.msra.mxu0 0
  %543 = vmatprep.mubr.bf16.mxu0 0
  %544 = vmatmul.mubr.bf16.gmra.mxu0 %v509
  %v545 = vpop.f32.mrf.mxu0
  %v546 = vadd.f32 %v494, %v545
  %v547 = vpop.f32.mrf.mxu0
  %v548 = vpop.f32.mrf.mxu0
  %v549 = vadd.f32 %v494, %v548
  %v550 = vpop.f32.mrf.mxu0
  %551 = vdwg.mxu0
  %s552 = scalar_lea.vmem %s7, 16
  %v553 = vld [vmem:[%s552] sm:$0xf]
  %v554 = vld [vmem:[%s552 + $0x4] sm:$0xf]
  %v555 = vld [vmem:[%s552 + $0x8] sm:$0xf]
  %v556 = vld [vmem:[%s552 + $0xc] sm:$0xf]
  %s557 = scalar_lea.vmem %s9, 1
  %v558 = vld [vmem:[%s557] sm:$0x1]
  %v560 = vlaneseq
  %v561 = vshrl.u32 %v560, 7
  %v562 = vsub.s32 0, %v561
  %v563 = vrot.slane %v558, %v562
  %v569 = vunpack.c.l.b16 %v553
  %v570 = vunpack.c.l.b16 %v554
  %v571 = vunpack.c.l.b16 %v555
  %v572 = vunpack.c.l.b16 %v556
  %v573 = vpack.c.b16 %v570, %v569
  %v574 = vpack.c.b16 %v572, %v571
  %577 = vmatprep.subr.bf16.mxu0 0
  %578 = vmatpush1.bf16.msra.mxu0 0
  %579 = vmatprep.subr.bf16.mxu0 0
  %580 = vmatpush1.bf16.msra.mxu0 0
  %581 = vmatprep.subr.bf16.mxu0 0
  %582 = vmatpush1.bf16.msra.mxu0 0
  %583 = vmatprep.subr.bf16.mxu0 0
  %584 = vmatpush1.bf16.msra.mxu0 0
  %585 = vmatprep.subr.bf16.mxu0 0
  %586 = vmatpush1.bf16.msra.mxu0 0
  %587 = vmatprep.subr.bf16.mxu0 0
  %588 = vmatpush1.bf16.msra.mxu0 0
  %589 = vmatprep.subr.bf16.mxu0 0
  %590 = vmatpush1.bf16.msra.mxu0 %v574
  %591 = vmatprep.subr.bf16.mxu0 0
  %592 = vmatpush1.bf16.msra.mxu0 %v573
  %593 = vmatprep.subr.bf16.mxu0 0
  %594 = vmatpush2.bf16.msra.mxu0 0
  %595 = vmatprep.subr.bf16.mxu0 0
  %596 = vmatpush2.bf16.msra.mxu0 0
  %597 = vmatprep.subr.bf16.mxu0 0
  %598 = vmatpush2.bf16.msra.mxu0 0
  %599 = vmatprep.subr.bf16.mxu0 0
  %600 = vmatpush2.bf16.msra.mxu0 0
  %601 = vmatprep.subr.bf16.mxu0 0
  %602 = vmatpush2.bf16.msra.mxu0 0
  %603 = vmatprep.subr.bf16.mxu0 0
  %604 = vmatpush2.bf16.msra.mxu0 0
  %605 = vmatprep.subr.bf16.mxu0 0
  %606 = vmatpush2.bf16.msra.mxu0 0
  %607 = vmatprep.subr.bf16.mxu0 0
  %608 = vmatpush2.bf16.msra.mxu0 0
  %609 = vmatprep.mubr.bf16.mxu0 0
  %610 = vmatmul.mubr.bf16.gmra.mxu0 %v509
  %v611 = vpop.f32.mrf.mxu0
  %v612 = vadd.f32 %v563, %v611
  %v613 = vpop.f32.mrf.mxu0
  %v614 = vpop.f32.mrf.mxu0
  %v615 = vadd.f32 %v563, %v614
  %v616 = vpop.f32.mrf.mxu0
  %617 = vdwg.mxu0
  %s618 = scalar_lea.vmem %s7, 32
  %v619 = vld [vmem:[%s618] sm:$0xf]
  %v620 = vld [vmem:[%s618 + $0x4] sm:$0xf]
  %v621 = vld [vmem:[%s618 + $0x8] sm:$0xf]
  %v622 = vld [vmem:[%s618 + $0xc] sm:$0xf]
  %s623 = scalar_lea.vmem %s9, 2
  %v624 = vld [vmem:[%s623] sm:$0x1]
  %v626 = vlaneseq
  %v627 = vshrl.u32 %v626, 7
  %v628 = vsub.s32 0, %v627
  %v629 = vrot.slane %v624, %v628
  %v635 = vunpack.c.l.b16 %v619
  %v636 = vunpack.c.l.b16 %v620
  %v637 = vunpack.c.l.b16 %v621
  %v638 = vunpack.c.l.b16 %v622
  %v639 = vpack.c.b16 %v636, %v635
  %v640 = vpack.c.b16 %v638, %v637
  %643 = vmatprep.subr.bf16.mxu0 0
  %644 = vmatpush1.bf16.msra.mxu0 0
  %645 = vmatprep.subr.bf16.mxu0 0
  %646 = vmatpush1.bf16.msra.mxu0 0
  %647 = vmatprep.subr.bf16.mxu0 0
  %648 = vmatpush1.bf16.msra.mxu0 0
  %649 = vmatprep.subr.bf16.mxu0 0
  %650 = vmatpush1.bf16.msra.mxu0 0
  %651 = vmatprep.subr.bf16.mxu0 0
  %652 = vmatpush1.bf16.msra.mxu0 0
  %653 = vmatprep.subr.bf16.mxu0 0
  %654 = vmatpush1.bf16.msra.mxu0 0
  %655 = vmatprep.subr.bf16.mxu0 0
  %656 = vmatpush1.bf16.msra.mxu0 %v640
  %657 = vmatprep.subr.bf16.mxu0 0
  %658 = vmatpush1.bf16.msra.mxu0 %v639
  %659 = vmatprep.subr.bf16.mxu0 0
  %660 = vmatpush2.bf16.msra.mxu0 0
  %661 = vmatprep.subr.bf16.mxu0 0
  %662 = vmatpush2.bf16.msra.mxu0 0
  %663 = vmatprep.subr.bf16.mxu0 0
  %664 = vmatpush2.bf16.msra.mxu0 0
  %665 = vmatprep.subr.bf16.mxu0 0
  %666 = vmatpush2.bf16.msra.mxu0 0
  %667 = vmatprep.subr.bf16.mxu0 0
  %668 = vmatpush2.bf16.msra.mxu0 0
  %669 = vmatprep.subr.bf16.mxu0 0
  %670 = vmatpush2.bf16.msra.mxu0 0
  %671 = vmatprep.subr.bf16.mxu0 0
  %672 = vmatpush2.bf16.msra.mxu0 0
  %673 = vmatprep.subr.bf16.mxu0 0
  %674 = vmatpush2.bf16.msra.mxu0 0
  %675 = vmatprep.mubr.bf16.mxu0 0
  %676 = vmatmul.mubr.bf16.gmra.mxu0 %v509
  %v677 = vpop.f32.mrf.mxu0
  %v678 = vadd.f32 %v629, %v677
  %v679 = vpop.f32.mrf.mxu0
  %v680 = vpop.f32.mrf.mxu0
  %v681 = vadd.f32 %v629, %v680
  %v682 = vpop.f32.mrf.mxu0
  %683 = vdwg.mxu0
  %v684 = vld [vmem:[%s8] sm:$0xf]
  %v685 = vld [vmem:[%s8 + $0x4] sm:$0xf]
  %v686 = vld [vmem:[%s8 + $0x8] sm:$0xf]
  %v687 = vld [vmem:[%s8 + $0xc] sm:$0xf]
  %v688 = vld [vmem:[%s10] sm:$0x1]
  %v690 = vlaneseq
  %v691 = vshrl.u32 %v690, 7
  %v692 = vsub.s32 0, %v691
  %v693 = vrot.slane %v688, %v692
  %v699 = vunpack.c.l.b16 %v684
  %v700 = vunpack.c.l.b16 %v685
  %v701 = vunpack.c.l.b16 %v686
  %v702 = vunpack.c.l.b16 %v687
  %v703 = vpack.c.b16 %v700, %v699
  %v704 = vpack.c.b16 %v702, %v701
  %v708 = vsel %vm259, %v484, 0
  %710 = vmatprep.subr.bf16.mxu0 0
  %711 = vmatpush1.bf16.msra.mxu0 0
  %712 = vmatprep.subr.bf16.mxu0 0
  %713 = vmatpush1.bf16.msra.mxu0 0
  %714 = vmatprep.subr.bf16.mxu0 0
  %715 = vmatpush1.bf16.msra.mxu0 0
  %716 = vmatprep.subr.bf16.mxu0 0
  %717 = vmatpush1.bf16.msra.mxu0 0
  %718 = vmatprep.subr.bf16.mxu0 0
  %719 = vmatpush1.bf16.msra.mxu0 0
  %720 = vmatprep.subr.bf16.mxu0 0
  %721 = vmatpush1.bf16.msra.mxu0 0
  %722 = vmatprep.subr.bf16.mxu0 0
  %723 = vmatpush1.bf16.msra.mxu0 %v704
  %724 = vmatprep.subr.bf16.mxu0 0
  %725 = vmatpush1.bf16.msra.mxu0 %v703
  %726 = vmatprep.subr.bf16.mxu0 0
  %727 = vmatpush2.bf16.msra.mxu0 0
  %728 = vmatprep.subr.bf16.mxu0 0
  %729 = vmatpush2.bf16.msra.mxu0 0
  %730 = vmatprep.subr.bf16.mxu0 0
  %731 = vmatpush2.bf16.msra.mxu0 0
  %732 = vmatprep.subr.bf16.mxu0 0
  %733 = vmatpush2.bf16.msra.mxu0 0
  %734 = vmatprep.subr.bf16.mxu0 0
  %735 = vmatpush2.bf16.msra.mxu0 0
  %736 = vmatprep.subr.bf16.mxu0 0
  %737 = vmatpush2.bf16.msra.mxu0 0
  %738 = vmatprep.subr.bf16.mxu0 0
  %739 = vmatpush2.bf16.msra.mxu0 0
  %740 = vmatprep.subr.bf16.mxu0 0
  %741 = vmatpush2.bf16.msra.mxu0 0
  %742 = vmatprep.mubr.bf16.mxu0 0
  %743 = vmatmul.mubr.bf16.gmra.mxu0 %v708
  %v744 = vpop.f32.mrf.mxu0
  %v745 = vadd.f32 %v693, %v744
  %v746 = vpop.f32.mrf.mxu0
  %v747 = vpop.f32.mrf.mxu0
  %v748 = vadd.f32 %v693, %v747
  %v749 = vpop.f32.mrf.mxu0
  %750 = vdwg.mxu0
  %s751 = scalar_lea.vmem %s8, 16
  %v752 = vld [vmem:[%s751] sm:$0xf]
  %v753 = vld [vmem:[%s751 + $0x4] sm:$0xf]
  %v754 = vld [vmem:[%s751 + $0x8] sm:$0xf]
  %v755 = vld [vmem:[%s751 + $0xc] sm:$0xf]
  %s756 = scalar_lea.vmem %s10, 1
  %v757 = vld [vmem:[%s756] sm:$0x1]
  %v759 = vlaneseq
  %v760 = vshrl.u32 %v759, 7
  %v761 = vsub.s32 0, %v760
  %v762 = vrot.slane %v757, %v761
  %v768 = vunpack.c.l.b16 %v752
  %v769 = vunpack.c.l.b16 %v753
  %v770 = vunpack.c.l.b16 %v754
  %v771 = vunpack.c.l.b16 %v755
  %v772 = vpack.c.b16 %v769, %v768
  %v773 = vpack.c.b16 %v771, %v770
  %776 = vmatprep.subr.bf16.mxu0 0
  %777 = vmatpush1.bf16.msra.mxu0 0
  %778 = vmatprep.subr.bf16.mxu0 0
  %779 = vmatpush1.bf16.msra.mxu0 0
  %780 = vmatprep.subr.bf16.mxu0 0
  %781 = vmatpush1.bf16.msra.mxu0 0
  %782 = vmatprep.subr.bf16.mxu0 0
  %783 = vmatpush1.bf16.msra.mxu0 0
  %784 = vmatprep.subr.bf16.mxu0 0
  %785 = vmatpush1.bf16.msra.mxu0 0
  %786 = vmatprep.subr.bf16.mxu0 0
  %787 = vmatpush1.bf16.msra.mxu0 0
  %788 = vmatprep.subr.bf16.mxu0 0
  %789 = vmatpush1.bf16.msra.mxu0 %v773
  %790 = vmatprep.subr.bf16.mxu0 0
  %791 = vmatpush1.bf16.msra.mxu0 %v772
  %792 = vmatprep.subr.bf16.mxu0 0
  %793 = vmatpush2.bf16.msra.mxu0 0
  %794 = vmatprep.subr.bf16.mxu0 0
  %795 = vmatpush2.bf16.msra.mxu0 0
  %796 = vmatprep.subr.bf16.mxu0 0
  %797 = vmatpush2.bf16.msra.mxu0 0
  %798 = vmatprep.subr.bf16.mxu0 0
  %799 = vmatpush2.bf16.msra.mxu0 0
  %800 = vmatprep.subr.bf16.mxu0 0
  %801 = vmatpush2.bf16.msra.mxu0 0
  %802 = vmatprep.subr.bf16.mxu0 0
  %803 = vmatpush2.bf16.msra.mxu0 0
  %804 = vmatprep.subr.bf16.mxu0 0
  %805 = vmatpush2.bf16.msra.mxu0 0
  %806 = vmatprep.subr.bf16.mxu0 0
  %807 = vmatpush2.bf16.msra.mxu0 0
  %808 = vmatprep.mubr.bf16.mxu0 0
  %809 = vmatmul.mubr.bf16.gmra.mxu0 %v708
  %v810 = vpop.f32.mrf.mxu0
  %v811 = vadd.f32 %v762, %v810
  %v812 = vpop.f32.mrf.mxu0
  %v813 = vpop.f32.mrf.mxu0
  %v814 = vadd.f32 %v762, %v813
  %v815 = vpop.f32.mrf.mxu0
  %816 = vdwg.mxu0
  %s817 = scalar_lea.vmem %s8, 32
  %v818 = vld [vmem:[%s817] sm:$0xf]
  %v819 = vld [vmem:[%s817 + $0x4] sm:$0xf]
  %v820 = vld [vmem:[%s817 + $0x8] sm:$0xf]
  %v821 = vld [vmem:[%s817 + $0xc] sm:$0xf]
  %s822 = scalar_lea.vmem %s10, 2
  %v823 = vld [vmem:[%s822] sm:$0x1]
  %v825 = vlaneseq
  %v826 = vshrl.u32 %v825, 7
  %v827 = vsub.s32 0, %v826
  %v828 = vrot.slane %v823, %v827
  %v834 = vunpack.c.l.b16 %v818
  %v835 = vunpack.c.l.b16 %v819
  %v836 = vunpack.c.l.b16 %v820
  %v837 = vunpack.c.l.b16 %v821
  %v838 = vpack.c.b16 %v835, %v834
  %v839 = vpack.c.b16 %v837, %v836
  %842 = vmatprep.subr.bf16.mxu0 0
  %843 = vmatpush1.bf16.msra.mxu0 0
  %844 = vmatprep.subr.bf16.mxu0 0
  %845 = vmatpush1.bf16.msra.mxu0 0
  %846 = vmatprep.subr.bf16.mxu0 0
  %847 = vmatpush1.bf16.msra.mxu0 0
  %848 = vmatprep.subr.bf16.mxu0 0
  %849 = vmatpush1.bf16.msra.mxu0 0
  %850 = vmatprep.subr.bf16.mxu0 0
  %851 = vmatpush1.bf16.msra.mxu0 0
  %852 = vmatprep.subr.bf16.mxu0 0
  %853 = vmatpush1.bf16.msra.mxu0 0
  %854 = vmatprep.subr.bf16.mxu0 0
  %855 = vmatpush1.bf16.msra.mxu0 %v839
  %856 = vmatprep.subr.bf16.mxu0 0
  %857 = vmatpush1.bf16.msra.mxu0 %v838
  %858 = vmatprep.subr.bf16.mxu0 0
  %859 = vmatpush2.bf16.msra.mxu0 0
  %860 = vmatprep.subr.bf16.mxu0 0
  %861 = vmatpush2.bf16.msra.mxu0 0
  %862 = vmatprep.subr.bf16.mxu0 0
  %863 = vmatpush2.bf16.msra.mxu0 0
  %864 = vmatprep.subr.bf16.mxu0 0
  %865 = vmatpush2.bf16.msra.mxu0 0
  %866 = vmatprep.subr.bf16.mxu0 0
  %867 = vmatpush2.bf16.msra.mxu0 0
  %868 = vmatprep.subr.bf16.mxu0 0
  %869 = vmatpush2.bf16.msra.mxu0 0
  %870 = vmatprep.subr.bf16.mxu0 0
  %871 = vmatpush2.bf16.msra.mxu0 0
  %872 = vmatprep.subr.bf16.mxu0 0
  %873 = vmatpush2.bf16.msra.mxu0 0
  %874 = vmatprep.mubr.bf16.mxu0 0
  %875 = vmatmul.mubr.bf16.gmra.mxu0 %v708
  %v876 = vpop.f32.mrf.mxu0
  %v877 = vadd.f32 %v828, %v876
  %v878 = vpop.f32.mrf.mxu0
  %v879 = vpop.f32.mrf.mxu0
  %v880 = vadd.f32 %v828, %v879
  %v881 = vpop.f32.mrf.mxu0
  %882 = vdwg.mxu0
  %v883 = vadd.f32 %v546, %v745
  %v884 = vadd.f32 %v549, %v748
  %v885 = vxor.u32 %v883, 2147483648
  %v886 = vxor.u32 %v884, 2147483648
  %v887 = vmul.f32 %v885, 1.442695
  %v888 = vpow.pop %v887
  %v889 = vmul.f32 %v886, 1.442695
  %v890 = vpow.pop %v889
  %v891 = vadd.f32 %v888, 1.0
  %v892 = vadd.f32 %v890, 1.0
  %v893 = vrcp.pop %v891
  %v894 = vmul.f32 1.0, %v893
  %v895 = vrcp.pop %v892
  %v896 = vmul.f32 1.0, %v895
  %v897 = vadd.f32 %v612, %v811
  %v898 = vadd.f32 %v615, %v814
  %v899 = vxor.u32 %v897, 2147483648
  %v900 = vxor.u32 %v898, 2147483648
  %v901 = vmul.f32 %v899, 1.442695
  %v902 = vpow.pop %v901
  %v903 = vmul.f32 %v900, 1.442695
  %v904 = vpow.pop %v903
  %v905 = vadd.f32 %v902, 1.0
  %v906 = vadd.f32 %v904, 1.0
  %v907 = vrcp.pop %v905
  %v908 = vmul.f32 1.0, %v907
  %v909 = vrcp.pop %v906
  %v910 = vmul.f32 1.0, %v909
  %v911 = vmul.f32 %v894, %v877
  %v912 = vmul.f32 %v896, %v880
  %v913 = vadd.f32 %v678, %v911
  %v914 = vadd.f32 %v681, %v912
  %v915 = vtanh.pop %v913
  %v916 = vtanh.pop %v914
  %v917 = vsub.f32 1.0, %v908
  %v918 = vsub.f32 1.0, %v910
  %v919 = vmul.f32 %v917, %v915
  %v920 = vmul.f32 %v918, %v916
  %v921 = vmul.f32 %v908, %v481
  %v922 = vmul.f32 %v910, %v482
  %v923 = vadd.f32 %v919, %v921
  %v924 = vadd.f32 %v920, %v922
  %s925 = scalar_lea.vmem %s15, 16
  %926 = vst.msk [vmem:[%s925] sm:$0xff] %vm259, %v923
  %927 = vst.msk [vmem:[%s925 + $0x8] sm:$0xff] %vm259, %v924
  %v928 = vpack.c.bf16 %v924, %v923
  %v929 = vld [vmem:[%s11] sm:$0xf]
  %v930 = vld [vmem:[%s11 + $0x4] sm:$0xf]
  %v931 = vld [vmem:[%s11 + $0x8] sm:$0xf]
  %v932 = vld [vmem:[%s11 + $0xc] sm:$0xf]
  %v937 = vunpack.c.l.b16 %v929
  %v938 = vunpack.c.l.b16 %v930
  %v939 = vunpack.c.l.b16 %v931
  %v940 = vunpack.c.l.b16 %v932
  %v941 = vpack.c.b16 %v938, %v937
  %v942 = vpack.c.b16 %v940, %v939
  %v946 = vsel %vm259, %v928, 0
  %948 = vmatprep.subr.bf16.mxu0 0
  %949 = vmatpush1.bf16.msra.mxu0 0
  %950 = vmatprep.subr.bf16.mxu0 0
  %951 = vmatpush1.bf16.msra.mxu0 0
  %952 = vmatprep.subr.bf16.mxu0 0
  %953 = vmatpush1.bf16.msra.mxu0 0
  %954 = vmatprep.subr.bf16.mxu0 0
  %955 = vmatpush1.bf16.msra.mxu0 0
  %956 = vmatprep.subr.bf16.mxu0 0
  %957 = vmatpush1.bf16.msra.mxu0 0
  %958 = vmatprep.subr.bf16.mxu0 0
  %959 = vmatpush1.bf16.msra.mxu0 0
  %960 = vmatprep.subr.bf16.mxu0 0
  %961 = vmatpush1.bf16.msra.mxu0 %v942
  %962 = vmatprep.subr.bf16.mxu0 0
  %963 = vmatpush1.bf16.msra.mxu0 %v941
  %964 = vmatprep.subr.bf16.mxu0 0
  %965 = vmatpush2.bf16.msra.mxu0 0
  %966 = vmatprep.subr.bf16.mxu0 0
  %967 = vmatpush2.bf16.msra.mxu0 0
  %968 = vmatprep.subr.bf16.mxu0 0
  %969 = vmatpush2.bf16.msra.mxu0 0
  %970 = vmatprep.subr.bf16.mxu0 0
  %971 = vmatpush2.bf16.msra.mxu0 0
  %972 = vmatprep.subr.bf16.mxu0 0
  %973 = vmatpush2.bf16.msra.mxu0 0
  %974 = vmatprep.subr.bf16.mxu0 0
  %975 = vmatpush2.bf16.msra.mxu0 0
  %976 = vmatprep.subr.bf16.mxu0 0
  %977 = vmatpush2.bf16.msra.mxu0 0
  %978 = vmatprep.subr.bf16.mxu0 0
  %979 = vmatpush2.bf16.msra.mxu0 0
  %980 = vmatprep.mubr.bf16.mxu0 0
  %981 = vmatmul.mubr.bf16.gmra.mxu0 %v946
  %v982 = vpop.f32.mrf.mxu0
  %v983 = vadd.f32 0.0, %v982
  %v984 = vpop.f32.mrf.mxu0
  %v985 = vpop.f32.mrf.mxu0
  %v986 = vadd.f32 0.0, %v985
  %v987 = vpop.f32.mrf.mxu0
  %988 = vdwg.mxu0
  %v989 = vld [vmem:[%s2] sm:$0xf]
  %v990 = vld [vmem:[%s2 + $0x4] sm:$0xf]
  %v991 = vld [vmem:[%s2 + $0x8] sm:$0xf]
  %v992 = vld [vmem:[%s2 + $0xc] sm:$0xf]
  %v993 = vld [vmem:[%s2 + $0x10] sm:$0xf]
  %v994 = vld [vmem:[%s2 + $0x14] sm:$0xf]
  %v995 = vld [vmem:[%s2 + $0x18] sm:$0xf]
  %v996 = vld [vmem:[%s2 + $0x1c] sm:$0xf]
  %v997 = vld [vmem:[%s2 + $0x20] sm:$0xf]
  %v998 = vld [vmem:[%s2 + $0x24] sm:$0xf]
  %v999 = vld [vmem:[%s2 + $0x28] sm:$0xf]
  %v1000 = vld [vmem:[%s2 + $0x2c] sm:$0xf]
  %v1001 = vld [vmem:[%s2 + $0x30] sm:$0xf]
  %v1002 = vld [vmem:[%s2 + $0x34] sm:$0xf]
  %v1003 = vld [vmem:[%s2 + $0x38] sm:$0xf]
  %v1004 = vld [vmem:[%s2 + $0x3c] sm:$0xf]
  %v1005 = vunpack.c.l.bf16 %v989
  %v1006 = vunpack.c.l.bf16 %v990
  %v1007 = vunpack.c.l.bf16 %v991
  %v1008 = vunpack.c.l.bf16 %v992
  %v1009 = vunpack.c.l.bf16 %v993
  %v1010 = vunpack.c.l.bf16 %v994
  %v1011 = vunpack.c.l.bf16 %v995
  %v1012 = vunpack.c.l.bf16 %v996
  %v1013 = vunpack.c.l.bf16 %v997
  %v1014 = vunpack.c.l.bf16 %v998
  %v1015 = vunpack.c.l.bf16 %v999
  %v1016 = vunpack.c.l.bf16 %v1000
  %v1017 = vunpack.c.l.bf16 %v1001
  %v1018 = vunpack.c.l.bf16 %v1002
  %v1019 = vunpack.c.l.bf16 %v1003
  %v1020 = vunpack.c.l.bf16 %v1004
  %v1023 = vcombine.high %v983, %v983
  %v1025 = vunpack.c.l.s4 1966171168
  %v1026 = vunpack.c.0.s8 %v1025
  %v1027 = vlaneseq
  %v1028 = vshrl.u32 %v1027, 7
  %v1029 = vsub.s32 %v1026, %v1028
  %v1030 = vrot.slane %v983, %v1029
  %v1032 = vunpack.c.l.s4 1966171168
  %v1033 = vunpack.c.0.s8 %v1032
  %v1034 = vlaneseq
  %v1035 = vshrl.u32 %v1034, 7
  %v1036 = vsub.s32 %v1033, %v1035
  %v1037 = vrot.slane %v1023, %v1036
  %v1038 = vcombine.high %v1030, %v1030
  %v1039 = vcombine.high %v1037, %v1037
  %v1041 = vunpack.c.l.s4 1966171168
  %v1042 = vunpack.c.0.s8 %v1041
  %v1043 = vlaneseq
  %v1044 = vshrl.u32 %v1043, 7
  %v1045 = vsub.s32 %v1042, %v1044
  %v1046 = vrot.slane %v1030, %v1045
  %v1048 = vunpack.c.l.s4 1966171168
  %v1049 = vunpack.c.0.s8 %v1048
  %v1050 = vlaneseq
  %v1051 = vshrl.u32 %v1050, 7
  %v1052 = vsub.s32 %v1049, %v1051
  %v1053 = vrot.slane %v1037, %v1052
  %v1055 = vunpack.c.l.s4 1966171168
  %v1056 = vunpack.c.0.s8 %v1055
  %v1057 = vlaneseq
  %v1058 = vshrl.u32 %v1057, 7
  %v1059 = vsub.s32 %v1056, %v1058
  %v1060 = vrot.slane %v1038, %v1059
  %v1062 = vunpack.c.l.s4 1966171168
  %v1063 = vunpack.c.0.s8 %v1062
  %v1064 = vlaneseq
  %v1065 = vshrl.u32 %v1064, 7
  %v1066 = vsub.s32 %v1063, %v1065
  %v1067 = vrot.slane %v1039, %v1066
  %v1068 = vcombine.high %v1046, %v1046
  %v1069 = vcombine.high %v1053, %v1053
  %v1070 = vcombine.high %v1060, %v1060
  %v1071 = vcombine.high %v1067, %v1067
  %v1072 = vcombine.high %v986, %v986
  %v1074 = vunpack.c.l.s4 1966171168
  %v1075 = vunpack.c.0.s8 %v1074
  %v1076 = vlaneseq
  %v1077 = vshrl.u32 %v1076, 7
  %v1078 = vsub.s32 %v1075, %v1077
  %v1079 = vrot.slane %v986, %v1078
  %v1081 = vunpack.c.l.s4 1966171168
  %v1082 = vunpack.c.0.s8 %v1081
  %v1083 = vlaneseq
  %v1084 = vshrl.u32 %v1083, 7
  %v1085 = vsub.s32 %v1082, %v1084
  %v1086 = vrot.slane %v1072, %v1085
  %v1087 = vcombine.high %v1079, %v1079
  %v1088 = vcombine.high %v1086, %v1086
  %v1090 = vunpack.c.l.s4 1966171168
  %v1091 = vunpack.c.0.s8 %v1090
  %v1092 = vlaneseq
  %v1093 = vshrl.u32 %v1092, 7
  %v1094 = vsub.s32 %v1091, %v1093
  %v1095 = vrot.slane %v1079, %v1094
  %v1097 = vunpack.c.l.s4 1966171168
  %v1098 = vunpack.c.0.s8 %v1097
  %v1099 = vlaneseq
  %v1100 = vshrl.u32 %v1099, 7
  %v1101 = vsub.s32 %v1098, %v1100
  %v1102 = vrot.slane %v1086, %v1101
  %v1104 = vunpack.c.l.s4 1966171168
  %v1105 = vunpack.c.0.s8 %v1104
  %v1106 = vlaneseq
  %v1107 = vshrl.u32 %v1106, 7
  %v1108 = vsub.s32 %v1105, %v1107
  %v1109 = vrot.slane %v1087, %v1108
  %v1111 = vunpack.c.l.s4 1966171168
  %v1112 = vunpack.c.0.s8 %v1111
  %v1113 = vlaneseq
  %v1114 = vshrl.u32 %v1113, 7
  %v1115 = vsub.s32 %v1112, %v1114
  %v1116 = vrot.slane %v1088, %v1115
  %v1117 = vcombine.high %v1095, %v1095
  %v1118 = vcombine.high %v1102, %v1102
  %v1119 = vcombine.high %v1109, %v1109
  %v1120 = vcombine.high %v1116, %v1116
  %v1121 = vlaneseq
  %v1122 = vshrl.u32 %v1121, 7
  %v1123 = vsub.s32 0, %v1122
  %v1124 = vrot.slane %v1046, %v1123
  %v1125 = vlaneseq
  %v1126 = vshrl.u32 %v1125, 7
  %v1127 = vsub.s32 0, %v1126
  %v1128 = vrot.slane %v1060, %v1127
  %v1129 = vlaneseq
  %v1130 = vshrl.u32 %v1129, 7
  %v1131 = vsub.s32 0, %v1130
  %v1132 = vrot.slane %v1068, %v1131
  %v1133 = vlaneseq
  %v1134 = vshrl.u32 %v1133, 7
  %v1135 = vsub.s32 0, %v1134
  %v1136 = vrot.slane %v1070, %v1135
  %v1137 = vlaneseq
  %v1138 = vshrl.u32 %v1137, 7
  %v1139 = vsub.s32 0, %v1138
  %v1140 = vrot.slane %v1053, %v1139
  %v1141 = vlaneseq
  %v1142 = vshrl.u32 %v1141, 7
  %v1143 = vsub.s32 0, %v1142
  %v1144 = vrot.slane %v1067, %v1143
  %v1145 = vlaneseq
  %v1146 = vshrl.u32 %v1145, 7
  %v1147 = vsub.s32 0, %v1146
  %v1148 = vrot.slane %v1069, %v1147
  %v1149 = vlaneseq
  %v1150 = vshrl.u32 %v1149, 7
  %v1151 = vsub.s32 0, %v1150
  %v1152 = vrot.slane %v1071, %v1151
  %v1153 = vlaneseq
  %v1154 = vshrl.u32 %v1153, 7
  %v1155 = vsub.s32 0, %v1154
  %v1156 = vrot.slane %v1095, %v1155
  %v1157 = vlaneseq
  %v1158 = vshrl.u32 %v1157, 7
  %v1159 = vsub.s32 0, %v1158
  %v1160 = vrot.slane %v1109, %v1159
  %v1161 = vlaneseq
  %v1162 = vshrl.u32 %v1161, 7
  %v1163 = vsub.s32 0, %v1162
  %v1164 = vrot.slane %v1117, %v1163
  %v1165 = vlaneseq
  %v1166 = vshrl.u32 %v1165, 7
  %v1167 = vsub.s32 0, %v1166
  %v1168 = vrot.slane %v1119, %v1167
  %v1169 = vlaneseq
  %v1170 = vshrl.u32 %v1169, 7
  %v1171 = vsub.s32 0, %v1170
  %v1172 = vrot.slane %v1102, %v1171
  %v1173 = vlaneseq
  %v1174 = vshrl.u32 %v1173, 7
  %v1175 = vsub.s32 0, %v1174
  %v1176 = vrot.slane %v1116, %v1175
  %v1177 = vlaneseq
  %v1178 = vshrl.u32 %v1177, 7
  %v1179 = vsub.s32 0, %v1178
  %v1180 = vrot.slane %v1118, %v1179
  %v1181 = vlaneseq
  %v1182 = vshrl.u32 %v1181, 7
  %v1183 = vsub.s32 0, %v1182
  %v1184 = vrot.slane %v1120, %v1183
  %v1201 = vmul.f32 %v1005, %v1124
  %v1202 = vmul.f32 %v1006, %v1128
  %v1203 = vmul.f32 %v1007, %v1132
  %v1204 = vmul.f32 %v1008, %v1136
  %v1205 = vmul.f32 %v1009, %v1140
  %v1206 = vmul.f32 %v1010, %v1144
  %v1207 = vmul.f32 %v1011, %v1148
  %v1208 = vmul.f32 %v1012, %v1152
  %v1209 = vmul.f32 %v1013, %v1156
  %v1210 = vmul.f32 %v1014, %v1160
  %v1211 = vmul.f32 %v1015, %v1164
  %v1212 = vmul.f32 %v1016, %v1168
  %v1213 = vmul.f32 %v1017, %v1172
  %v1214 = vmul.f32 %v1018, %v1176
  %v1215 = vmul.f32 %v1019, %v1180
  %v1216 = vmul.f32 %v1020, %v1184
  %v1217 = vsel %vm259, %v1201, 0.0
  %1218 = vadd.xlane.f32.xlu0 %v1217
  %v1219 = vpop.xlane.xlu0 %1218
  %v1220 = vsel %vm259, %v1202, 0.0
  %1221 = vadd.xlane.f32.xlu0 %v1220
  %v1222 = vpop.xlane.xlu0 %1221
  %v1223 = vsel %vm259, %v1203, 0.0
  %1224 = vadd.xlane.f32.xlu0 %v1223
  %v1225 = vpop.xlane.xlu0 %1224
  %v1226 = vsel %vm259, %v1204, 0.0
  %1227 = vadd.xlane.f32.xlu0 %v1226
  %v1228 = vpop.xlane.xlu0 %1227
  %v1229 = vsel %vm259, %v1205, 0.0
  %1230 = vadd.xlane.f32.xlu0 %v1229
  %v1231 = vpop.xlane.xlu0 %1230
  %v1232 = vsel %vm259, %v1206, 0.0
  %1233 = vadd.xlane.f32.xlu0 %v1232
  %v1234 = vpop.xlane.xlu0 %1233
  %v1235 = vsel %vm259, %v1207, 0.0
  %1236 = vadd.xlane.f32.xlu0 %v1235
  %v1237 = vpop.xlane.xlu0 %1236
  %v1238 = vsel %vm259, %v1208, 0.0
  %1239 = vadd.xlane.f32.xlu0 %v1238
  %v1240 = vpop.xlane.xlu0 %1239
  %v1241 = vsel %vm259, %v1209, 0.0
  %1242 = vadd.xlane.f32.xlu0 %v1241
  %v1243 = vpop.xlane.xlu0 %1242
  %v1244 = vsel %vm259, %v1210, 0.0
  %1245 = vadd.xlane.f32.xlu0 %v1244
  %v1246 = vpop.xlane.xlu0 %1245
  %v1247 = vsel %vm259, %v1211, 0.0
  %1248 = vadd.xlane.f32.xlu0 %v1247
  %v1249 = vpop.xlane.xlu0 %1248
  %v1250 = vsel %vm259, %v1212, 0.0
  %1251 = vadd.xlane.f32.xlu0 %v1250
  %v1252 = vpop.xlane.xlu0 %1251
  %v1253 = vsel %vm259, %v1213, 0.0
  %1254 = vadd.xlane.f32.xlu0 %v1253
  %v1255 = vpop.xlane.xlu0 %1254
  %v1256 = vsel %vm259, %v1214, 0.0
  %1257 = vadd.xlane.f32.xlu0 %v1256
  %v1258 = vpop.xlane.xlu0 %1257
  %v1259 = vsel %vm259, %v1215, 0.0
  %1260 = vadd.xlane.f32.xlu0 %v1259
  %v1261 = vpop.xlane.xlu0 %1260
  %v1262 = vsel %vm259, %v1216, 0.0
  %1263 = vadd.xlane.f32.xlu0 %v1262
  %v1264 = vpop.xlane.xlu0 %1263
  %v1281 = vlaneseq
  %v1282 = vand.u32 %v1281, 127
  %v1283 = vlaneseq
  %v1284 = vshrl.u32 %v1283, 7
  %v1285 = vsub.s32 %v1282, %v1284
  %v1286 = vrot.slane %v1219, %v1285
  %v1287 = vlaneseq
  %v1288 = vshrl.u32 %v1287, 7
  %v1289 = vsub.s32 %v1282, %v1288
  %v1290 = vrot.slane %v1222, %v1289
  %v1291 = vlaneseq
  %v1292 = vshrl.u32 %v1291, 7
  %v1293 = vsub.s32 %v1282, %v1292
  %v1294 = vrot.slane %v1225, %v1293
  %v1295 = vlaneseq
  %v1296 = vshrl.u32 %v1295, 7
  %v1297 = vsub.s32 %v1282, %v1296
  %v1298 = vrot.slane %v1228, %v1297
  %v1299 = vlaneseq
  %v1300 = vshrl.u32 %v1299, 7
  %v1301 = vsub.s32 %v1282, %v1300
  %v1302 = vrot.slane %v1231, %v1301
  %v1303 = vlaneseq
  %v1304 = vshrl.u32 %v1303, 7
  %v1305 = vsub.s32 %v1282, %v1304
  %v1306 = vrot.slane %v1234, %v1305
  %v1307 = vlaneseq
  %v1308 = vshrl.u32 %v1307, 7
  %v1309 = vsub.s32 %v1282, %v1308
  %v1310 = vrot.slane %v1237, %v1309
  %v1311 = vlaneseq
  %v1312 = vshrl.u32 %v1311, 7
  %v1313 = vsub.s32 %v1282, %v1312
  %v1314 = vrot.slane %v1240, %v1313
  %v1315 = vlaneseq
  %v1316 = vshrl.u32 %v1315, 7
  %v1317 = vsub.s32 %v1282, %v1316
  %v1318 = vrot.slane %v1243, %v1317
  %v1319 = vlaneseq
  %v1320 = vshrl.u32 %v1319, 7
  %v1321 = vsub.s32 %v1282, %v1320
  %v1322 = vrot.slane %v1246, %v1321
  %v1323 = vlaneseq
  %v1324 = vshrl.u32 %v1323, 7
  %v1325 = vsub.s32 %v1282, %v1324
  %v1326 = vrot.slane %v1249, %v1325
  %v1327 = vlaneseq
  %v1328 = vshrl.u32 %v1327, 7
  %v1329 = vsub.s32 %v1282, %v1328
  %v1330 = vrot.slane %v1252, %v1329
  %v1331 = vlaneseq
  %v1332 = vshrl.u32 %v1331, 7
  %v1333 = vsub.s32 %v1282, %v1332
  %v1334 = vrot.slane %v1255, %v1333
  %v1335 = vlaneseq
  %v1336 = vshrl.u32 %v1335, 7
  %v1337 = vsub.s32 %v1282, %v1336
  %v1338 = vrot.slane %v1258, %v1337
  %v1339 = vlaneseq
  %v1340 = vshrl.u32 %v1339, 7
  %v1341 = vsub.s32 %v1282, %v1340
  %v1342 = vrot.slane %v1261, %v1341
  %v1343 = vlaneseq
  %v1344 = vshrl.u32 %v1343, 7
  %v1345 = vsub.s32 %v1282, %v1344
  %v1346 = vrot.slane %v1264, %v1345
  %vm1347 = vcmask 1041409
  %v1348 = vsel %vm1347, %v1290, %v1286
  %vm1349 = vcmask 1042434
  %v1350 = vsel %vm1349, %v1294, %v1348
  %vm1351 = vcmask 1043459
  %v1352 = vsel %vm1351, %v1298, %v1350
  %vm1353 = vcmask 1044484
  %v1354 = vsel %vm1353, %v1302, %v1352
  %vm1355 = vcmask 1045509
  %v1356 = vsel %vm1355, %v1306, %v1354
  %vm1357 = vcmask 1046534
  %v1358 = vsel %vm1357, %v1310, %v1356
  %vm1359 = vcmask 1047559
  %v1360 = vsel %vm1359, %v1314, %v1358
  %v1361 = vsel %vm1347, %v1322, %v1318
  %v1362 = vsel %vm1349, %v1326, %v1361
  %v1363 = vsel %vm1351, %v1330, %v1362
  %v1364 = vsel %vm1353, %v1334, %v1363
  %v1365 = vsel %vm1355, %v1338, %v1364
  %v1366 = vsel %vm1357, %v1342, %v1365
  %v1367 = vsel %vm1359, %v1346, %v1366
  %vm1370 = vcmask 64512
  %v1371 = vsel %vm1370, %v1360, -inf
  %1372 = vmax.xlane.f32.xlu0 %v1371
  %v1373 = vpop.xlane.xlu0 %1372
  %v1374 = vsel %vm1370, %v1367, -inf
  %1375 = vmax.xlane.f32.xlu0 %v1374
  %v1376 = vpop.xlane.xlu0 %1375
  %v1379 = vlaneseq
  %v1380 = vshrl.u32 %v1379, 7
  %v1381 = vsub.s32 0, %v1380
  %v1382 = vrot.slane %v1373, %v1381
  %v1383 = vlaneseq
  %v1384 = vshrl.u32 %v1383, 7
  %v1385 = vsub.s32 1, %v1384
  %v1386 = vrot.slane %v1373, %v1385
  %v1387 = vlaneseq
  %v1388 = vshrl.u32 %v1387, 7
  %v1389 = vsub.s32 2, %v1388
  %v1390 = vrot.slane %v1373, %v1389
  %v1391 = vlaneseq
  %v1392 = vshrl.u32 %v1391, 7
  %v1393 = vsub.s32 3, %v1392
  %v1394 = vrot.slane %v1373, %v1393
  %v1395 = vlaneseq
  %v1396 = vshrl.u32 %v1395, 7
  %v1397 = vsub.s32 4, %v1396
  %v1398 = vrot.slane %v1373, %v1397
  %v1399 = vlaneseq
  %v1400 = vshrl.u32 %v1399, 7
  %v1401 = vsub.s32 5, %v1400
  %v1402 = vrot.slane %v1373, %v1401
  %v1403 = vlaneseq
  %v1404 = vshrl.u32 %v1403, 7
  %v1405 = vsub.s32 6, %v1404
  %v1406 = vrot.slane %v1373, %v1405
  %v1407 = vlaneseq
  %v1408 = vshrl.u32 %v1407, 7
  %v1409 = vsub.s32 7, %v1408
  %v1410 = vrot.slane %v1373, %v1409
  %v1411 = vlaneseq
  %v1412 = vshrl.u32 %v1411, 7
  %v1413 = vsub.s32 0, %v1412
  %v1414 = vrot.slane %v1376, %v1413
  %v1415 = vlaneseq
  %v1416 = vshrl.u32 %v1415, 7
  %v1417 = vsub.s32 1, %v1416
  %v1418 = vrot.slane %v1376, %v1417
  %v1419 = vlaneseq
  %v1420 = vshrl.u32 %v1419, 7
  %v1421 = vsub.s32 2, %v1420
  %v1422 = vrot.slane %v1376, %v1421
  %v1423 = vlaneseq
  %v1424 = vshrl.u32 %v1423, 7
  %v1425 = vsub.s32 3, %v1424
  %v1426 = vrot.slane %v1376, %v1425
  %v1427 = vlaneseq
  %v1428 = vshrl.u32 %v1427, 7
  %v1429 = vsub.s32 4, %v1428
  %v1430 = vrot.slane %v1376, %v1429
  %v1431 = vlaneseq
  %v1432 = vshrl.u32 %v1431, 7
  %v1433 = vsub.s32 5, %v1432
  %v1434 = vrot.slane %v1376, %v1433
  %v1435 = vlaneseq
  %v1436 = vshrl.u32 %v1435, 7
  %v1437 = vsub.s32 6, %v1436
  %v1438 = vrot.slane %v1376, %v1437
  %v1439 = vlaneseq
  %v1440 = vshrl.u32 %v1439, 7
  %v1441 = vsub.s32 7, %v1440
  %v1442 = vrot.slane %v1376, %v1441
  %v1459 = vsub.f32 %v1219, %v1382
  %v1460 = vsub.f32 %v1222, %v1386
  %v1461 = vsub.f32 %v1225, %v1390
  %v1462 = vsub.f32 %v1228, %v1394
  %v1463 = vsub.f32 %v1231, %v1398
  %v1464 = vsub.f32 %v1234, %v1402
  %v1465 = vsub.f32 %v1237, %v1406
  %v1466 = vsub.f32 %v1240, %v1410
  %v1467 = vsub.f32 %v1243, %v1414
  %v1468 = vsub.f32 %v1246, %v1418
  %v1469 = vsub.f32 %v1249, %v1422
  %v1470 = vsub.f32 %v1252, %v1426
  %v1471 = vsub.f32 %v1255, %v1430
  %v1472 = vsub.f32 %v1258, %v1434
  %v1473 = vsub.f32 %v1261, %v1438
  %v1474 = vsub.f32 %v1264, %v1442
  %v1475 = vmul.f32 %v1459, 1.442695
  %v1476 = vpow.pop %v1475
  %v1477 = vmul.f32 %v1460, 1.442695
  %v1478 = vpow.pop %v1477
  %v1479 = vmul.f32 %v1461, 1.442695
  %v1480 = vpow.pop %v1479
  %v1481 = vmul.f32 %v1462, 1.442695
  %v1482 = vpow.pop %v1481
  %v1483 = vmul.f32 %v1463, 1.442695
  %v1484 = vpow.pop %v1483
  %v1485 = vmul.f32 %v1464, 1.442695
  %v1486 = vpow.pop %v1485
  %v1487 = vmul.f32 %v1465, 1.442695
  %v1488 = vpow.pop %v1487
  %v1489 = vmul.f32 %v1466, 1.442695
  %v1490 = vpow.pop %v1489
  %v1491 = vmul.f32 %v1467, 1.442695
  %v1492 = vpow.pop %v1491
  %v1493 = vmul.f32 %v1468, 1.442695
  %v1494 = vpow.pop %v1493
  %v1495 = vmul.f32 %v1469, 1.442695
  %v1496 = vpow.pop %v1495
  %v1497 = vmul.f32 %v1470, 1.442695
  %v1498 = vpow.pop %v1497
  %v1499 = vmul.f32 %v1471, 1.442695
  %v1500 = vpow.pop %v1499
  %v1501 = vmul.f32 %v1472, 1.442695
  %v1502 = vpow.pop %v1501
  %v1503 = vmul.f32 %v1473, 1.442695
  %v1504 = vpow.pop %v1503
  %v1505 = vmul.f32 %v1474, 1.442695
  %v1506 = vpow.pop %v1505
  %1523 = vset.pattern.permute.xlu0 0
  %1524 = vperm.xlu0 %1523, %v1476
  %v1525 = vpop.permute.xlu0 %1524
  %1526 = vset.pattern.permute.xlu0 0
  %1527 = vperm.xlu0 %1526, %v1478
  %v1528 = vpop.permute.xlu0 %1527
  %1529 = vset.pattern.permute.xlu0 0
  %1530 = vperm.xlu0 %1529, %v1480
  %v1531 = vpop.permute.xlu0 %1530
  %1532 = vset.pattern.permute.xlu0 0
  %1533 = vperm.xlu0 %1532, %v1482
  %v1534 = vpop.permute.xlu0 %1533
  %1535 = vset.pattern.permute.xlu0 0
  %1536 = vperm.xlu0 %1535, %v1484
  %v1537 = vpop.permute.xlu0 %1536
  %1538 = vset.pattern.permute.xlu0 0
  %1539 = vperm.xlu0 %1538, %v1486
  %v1540 = vpop.permute.xlu0 %1539
  %1541 = vset.pattern.permute.xlu0 0
  %1542 = vperm.xlu0 %1541, %v1488
  %v1543 = vpop.permute.xlu0 %1542
  %1544 = vset.pattern.permute.xlu0 0
  %1545 = vperm.xlu0 %1544, %v1490
  %v1546 = vpop.permute.xlu0 %1545
  %1547 = vset.pattern.permute.xlu0 0
  %1548 = vperm.xlu0 %1547, %v1492
  %v1549 = vpop.permute.xlu0 %1548
  %1550 = vset.pattern.permute.xlu0 0
  %1551 = vperm.xlu0 %1550, %v1494
  %v1552 = vpop.permute.xlu0 %1551
  %1553 = vset.pattern.permute.xlu0 0
  %1554 = vperm.xlu0 %1553, %v1496
  %v1555 = vpop.permute.xlu0 %1554
  %1556 = vset.pattern.permute.xlu0 0
  %1557 = vperm.xlu0 %1556, %v1498
  %v1558 = vpop.permute.xlu0 %1557
  %1559 = vset.pattern.permute.xlu0 0
  %1560 = vperm.xlu0 %1559, %v1500
  %v1561 = vpop.permute.xlu0 %1560
  %1562 = vset.pattern.permute.xlu0 0
  %1563 = vperm.xlu0 %1562, %v1502
  %v1564 = vpop.permute.xlu0 %1563
  %1565 = vset.pattern.permute.xlu0 0
  %1566 = vperm.xlu0 %1565, %v1504
  %v1567 = vpop.permute.xlu0 %1566
  %1568 = vset.pattern.permute.xlu0 0
  %1569 = vperm.xlu0 %1568, %v1506
  %v1570 = vpop.permute.xlu0 %1569
  %v1571 = vlaneseq
  %v1572 = vshrl.u32 %v1571, 7
  %v1573 = vsub.s32 %v1282, %v1572
  %v1574 = vrot.slane %v1525, %v1573
  %v1575 = vlaneseq
  %v1576 = vshrl.u32 %v1575, 7
  %v1577 = vsub.s32 %v1282, %v1576
  %v1578 = vrot.slane %v1528, %v1577
  %v1579 = vlaneseq
  %v1580 = vshrl.u32 %v1579, 7
  %v1581 = vsub.s32 %v1282, %v1580
  %v1582 = vrot.slane %v1531, %v1581
  %v1583 = vlaneseq
  %v1584 = vshrl.u32 %v1583, 7
  %v1585 = vsub.s32 %v1282, %v1584
  %v1586 = vrot.slane %v1534, %v1585
  %v1587 = vlaneseq
  %v1588 = vshrl.u32 %v1587, 7
  %v1589 = vsub.s32 %v1282, %v1588
  %v1590 = vrot.slane %v1537, %v1589
  %v1591 = vlaneseq
  %v1592 = vshrl.u32 %v1591, 7
  %v1593 = vsub.s32 %v1282, %v1592
  %v1594 = vrot.slane %v1540, %v1593
  %v1595 = vlaneseq
  %v1596 = vshrl.u32 %v1595, 7
  %v1597 = vsub.s32 %v1282, %v1596
  %v1598 = vrot.slane %v1543, %v1597
  %v1599 = vlaneseq
  %v1600 = vshrl.u32 %v1599, 7
  %v1601 = vsub.s32 %v1282, %v1600
  %v1602 = vrot.slane %v1546, %v1601
  %v1603 = vlaneseq
  %v1604 = vshrl.u32 %v1603, 7
  %v1605 = vsub.s32 %v1282, %v1604
  %v1606 = vrot.slane %v1549, %v1605
  %v1607 = vlaneseq
  %v1608 = vshrl.u32 %v1607, 7
  %v1609 = vsub.s32 %v1282, %v1608
  %v1610 = vrot.slane %v1552, %v1609
  %v1611 = vlaneseq
  %v1612 = vshrl.u32 %v1611, 7
  %v1613 = vsub.s32 %v1282, %v1612
  %v1614 = vrot.slane %v1555, %v1613
  %v1615 = vlaneseq
  %v1616 = vshrl.u32 %v1615, 7
  %v1617 = vsub.s32 %v1282, %v1616
  %v1618 = vrot.slane %v1558, %v1617
  %v1619 = vlaneseq
  %v1620 = vshrl.u32 %v1619, 7
  %v1621 = vsub.s32 %v1282, %v1620
  %v1622 = vrot.slane %v1561, %v1621
  %v1623 = vlaneseq
  %v1624 = vshrl.u32 %v1623, 7
  %v1625 = vsub.s32 %v1282, %v1624
  %v1626 = vrot.slane %v1564, %v1625
  %v1627 = vlaneseq
  %v1628 = vshrl.u32 %v1627, 7
  %v1629 = vsub.s32 %v1282, %v1628
  %v1630 = vrot.slane %v1567, %v1629
  %v1631 = vlaneseq
  %v1632 = vshrl.u32 %v1631, 7
  %v1633 = vsub.s32 %v1282, %v1632
  %v1634 = vrot.slane %v1570, %v1633
  %v1635 = vsel %vm1347, %v1578, %v1574
  %v1636 = vsel %vm1349, %v1582, %v1635
  %v1637 = vsel %vm1351, %v1586, %v1636
  %v1638 = vsel %vm1353, %v1590, %v1637
  %v1639 = vsel %vm1355, %v1594, %v1638
  %v1640 = vsel %vm1357, %v1598, %v1639
  %v1641 = vsel %vm1359, %v1602, %v1640
  %v1642 = vsel %vm1347, %v1610, %v1606
  %v1643 = vsel %vm1349, %v1614, %v1642
  %v1644 = vsel %vm1351, %v1618, %v1643
  %v1645 = vsel %vm1353, %v1622, %v1644
  %v1646 = vsel %vm1355, %v1626, %v1645
  %v1647 = vsel %vm1357, %v1630, %v1646
  %v1648 = vsel %vm1359, %v1634, %v1647
  %v1651 = vsel %vm1370, %v1641, 0.0
  %1652 = vadd.xlane.f32.xlu0 %v1651
  %v1653 = vpop.xlane.xlu0 %1652
  %v1654 = vsel %vm1370, %v1648, 0.0
  %1655 = vadd.xlane.f32.xlu0 %v1654
  %v1656 = vpop.xlane.xlu0 %1655
  %v1659 = vlaneseq
  %v1660 = vshrl.u32 %v1659, 7
  %v1661 = vsub.s32 0, %v1660
  %v1662 = vrot.slane %v1653, %v1661
  %v1663 = vlaneseq
  %v1664 = vshrl.u32 %v1663, 7
  %v1665 = vsub.s32 1, %v1664
  %v1666 = vrot.slane %v1653, %v1665
  %v1667 = vlaneseq
  %v1668 = vshrl.u32 %v1667, 7
  %v1669 = vsub.s32 2, %v1668
  %v1670 = vrot.slane %v1653, %v1669
  %v1671 = vlaneseq
  %v1672 = vshrl.u32 %v1671, 7
  %v1673 = vsub.s32 3, %v1672
  %v1674 = vrot.slane %v1653, %v1673
  %v1675 = vlaneseq
  %v1676 = vshrl.u32 %v1675, 7
  %v1677 = vsub.s32 4, %v1676
  %v1678 = vrot.slane %v1653, %v1677
  %v1679 = vlaneseq
  %v1680 = vshrl.u32 %v1679, 7
  %v1681 = vsub.s32 5, %v1680
  %v1682 = vrot.slane %v1653, %v1681
  %v1683 = vlaneseq
  %v1684 = vshrl.u32 %v1683, 7
  %v1685 = vsub.s32 6, %v1684
  %v1686 = vrot.slane %v1653, %v1685
  %v1687 = vlaneseq
  %v1688 = vshrl.u32 %v1687, 7
  %v1689 = vsub.s32 7, %v1688
  %v1690 = vrot.slane %v1653, %v1689
  %v1691 = vlaneseq
  %v1692 = vshrl.u32 %v1691, 7
  %v1693 = vsub.s32 0, %v1692
  %v1694 = vrot.slane %v1656, %v1693
  %v1695 = vlaneseq
  %v1696 = vshrl.u32 %v1695, 7
  %v1697 = vsub.s32 1, %v1696
  %v1698 = vrot.slane %v1656, %v1697
  %v1699 = vlaneseq
  %v1700 = vshrl.u32 %v1699, 7
  %v1701 = vsub.s32 2, %v1700
  %v1702 = vrot.slane %v1656, %v1701
  %v1703 = vlaneseq
  %v1704 = vshrl.u32 %v1703, 7
  %v1705 = vsub.s32 3, %v1704
  %v1706 = vrot.slane %v1656, %v1705
  %v1707 = vlaneseq
  %v1708 = vshrl.u32 %v1707, 7
  %v1709 = vsub.s32 4, %v1708
  %v1710 = vrot.slane %v1656, %v1709
  %v1711 = vlaneseq
  %v1712 = vshrl.u32 %v1711, 7
  %v1713 = vsub.s32 5, %v1712
  %v1714 = vrot.slane %v1656, %v1713
  %v1715 = vlaneseq
  %v1716 = vshrl.u32 %v1715, 7
  %v1717 = vsub.s32 6, %v1716
  %v1718 = vrot.slane %v1656, %v1717
  %v1719 = vlaneseq
  %v1720 = vshrl.u32 %v1719, 7
  %v1721 = vsub.s32 7, %v1720
  %v1722 = vrot.slane %v1656, %v1721
  %v1739 = vrcp.pop %v1662
  %v1740 = vmul.f32 %v1476, %v1739
  %v1741 = vrcp.pop %v1666
  %v1742 = vmul.f32 %v1478, %v1741
  %v1743 = vrcp.pop %v1670
  %v1744 = vmul.f32 %v1480, %v1743
  %v1745 = vrcp.pop %v1674
  %v1746 = vmul.f32 %v1482, %v1745
  %v1747 = vrcp.pop %v1678
  %v1748 = vmul.f32 %v1484, %v1747
  %v1749 = vrcp.pop %v1682
  %v1750 = vmul.f32 %v1486, %v1749
  %v1751 = vrcp.pop %v1686
  %v1752 = vmul.f32 %v1488, %v1751
  %v1753 = vrcp.pop %v1690
  %v1754 = vmul.f32 %v1490, %v1753
  %v1755 = vrcp.pop %v1694
  %v1756 = vmul.f32 %v1492, %v1755
  %v1757 = vrcp.pop %v1698
  %v1758 = vmul.f32 %v1494, %v1757
  %v1759 = vrcp.pop %v1702
  %v1760 = vmul.f32 %v1496, %v1759
  %v1761 = vrcp.pop %v1706
  %v1762 = vmul.f32 %v1498, %v1761
  %v1763 = vrcp.pop %v1710
  %v1764 = vmul.f32 %v1500, %v1763
  %v1765 = vrcp.pop %v1714
  %v1766 = vmul.f32 %v1502, %v1765
  %v1767 = vrcp.pop %v1718
  %v1768 = vmul.f32 %v1504, %v1767
  %v1769 = vrcp.pop %v1722
  %v1770 = vmul.f32 %v1506, %v1769
  %1772 = vset.pattern.permute.xlu0 0
  %1773 = vperm.xlu0 %1772, %v1740
  %v1774 = vpop.permute.xlu0 %1773
  %1777 = vset.pattern.permute.xlu0 0
  %1778 = vperm.xlu0 %1777, %v1742
  %v1779 = vpop.permute.xlu0 %1778
  %1782 = vset.pattern.permute.xlu0 0
  %1783 = vperm.xlu0 %1782, %v1744
  %v1784 = vpop.permute.xlu0 %1783
  %1787 = vset.pattern.permute.xlu0 0
  %1788 = vperm.xlu0 %1787, %v1746
  %v1789 = vpop.permute.xlu0 %1788
  %1792 = vset.pattern.permute.xlu0 0
  %1793 = vperm.xlu0 %1792, %v1748
  %v1794 = vpop.permute.xlu0 %1793
  %1797 = vset.pattern.permute.xlu0 0
  %1798 = vperm.xlu0 %1797, %v1750
  %v1799 = vpop.permute.xlu0 %1798
  %1802 = vset.pattern.permute.xlu0 0
  %1803 = vperm.xlu0 %1802, %v1752
  %v1804 = vpop.permute.xlu0 %1803
  %1807 = vset.pattern.permute.xlu0 0
  %1808 = vperm.xlu0 %1807, %v1754
  %v1809 = vpop.permute.xlu0 %1808
  %1812 = vset.pattern.permute.xlu0 0
  %1813 = vperm.xlu0 %1812, %v1756
  %v1814 = vpop.permute.xlu0 %1813
  %1817 = vset.pattern.permute.xlu0 0
  %1818 = vperm.xlu0 %1817, %v1758
  %v1819 = vpop.permute.xlu0 %1818
  %1822 = vset.pattern.permute.xlu0 0
  %1823 = vperm.xlu0 %1822, %v1760
  %v1824 = vpop.permute.xlu0 %1823
  %1827 = vset.pattern.permute.xlu0 0
  %1828 = vperm.xlu0 %1827, %v1762
  %v1829 = vpop.permute.xlu0 %1828
  %1832 = vset.pattern.permute.xlu0 0
  %1833 = vperm.xlu0 %1832, %v1764
  %v1834 = vpop.permute.xlu0 %1833
  %1837 = vset.pattern.permute.xlu0 0
  %1838 = vperm.xlu0 %1837, %v1766
  %v1839 = vpop.permute.xlu0 %1838
  %1842 = vset.pattern.permute.xlu0 0
  %1843 = vperm.xlu0 %1842, %v1768
  %v1844 = vpop.permute.xlu0 %1843
  %1847 = vset.pattern.permute.xlu0 0
  %1848 = vperm.xlu0 %1847, %v1770
  %v1849 = vpop.permute.xlu0 %1848
  %v1851 = vmul.f32 %v1774, %v1005
  %v1852 = vmul.f32 %v1779, %v1006
  %v1853 = vmul.f32 %v1784, %v1007
  %v1854 = vmul.f32 %v1789, %v1008
  %v1855 = vmul.f32 %v1794, %v1009
  %v1856 = vmul.f32 %v1799, %v1010
  %v1857 = vmul.f32 %v1804, %v1011
  %v1858 = vmul.f32 %v1809, %v1012
  %v1859 = vmul.f32 %v1814, %v1013
  %v1860 = vmul.f32 %v1819, %v1014
  %v1861 = vmul.f32 %v1824, %v1015
  %v1862 = vmul.f32 %v1829, %v1016
  %v1863 = vmul.f32 %v1834, %v1017
  %v1864 = vmul.f32 %v1839, %v1018
  %v1865 = vmul.f32 %v1844, %v1019
  %v1866 = vmul.f32 %v1849, %v1020
  %v1867 = vsel %vm259, %v1851, 0.0
  %v1868 = vrot.slane %v1867, 4
  %v1869 = vadd.f32 %v1867, %v1868
  %v1870 = vrot.slane %v1869, 2
  %v1871 = vadd.f32 %v1869, %v1870
  %v1872 = vrot.slane %v1871, 1
  %v1873 = vadd.f32 %v1871, %v1872
  %v1874 = vsel %vm259, %v1852, 0.0
  %v1875 = vrot.slane %v1874, 4
  %v1876 = vadd.f32 %v1874, %v1875
  %v1877 = vrot.slane %v1876, 2
  %v1878 = vadd.f32 %v1876, %v1877
  %v1879 = vrot.slane %v1878, 1
  %v1880 = vadd.f32 %v1878, %v1879
  %v1881 = vsel %vm259, %v1853, 0.0
  %v1882 = vrot.slane %v1881, 4
  %v1883 = vadd.f32 %v1881, %v1882
  %v1884 = vrot.slane %v1883, 2
  %v1885 = vadd.f32 %v1883, %v1884
  %v1886 = vrot.slane %v1885, 1
  %v1887 = vadd.f32 %v1885, %v1886
  %v1888 = vsel %vm259, %v1854, 0.0
  %v1889 = vrot.slane %v1888, 4
  %v1890 = vadd.f32 %v1888, %v1889
  %v1891 = vrot.slane %v1890, 2
  %v1892 = vadd.f32 %v1890, %v1891
  %v1893 = vrot.slane %v1892, 1
  %v1894 = vadd.f32 %v1892, %v1893
  %v1895 = vsel %vm259, %v1855, 0.0
  %v1896 = vrot.slane %v1895, 4
  %v1897 = vadd.f32 %v1895, %v1896
  %v1898 = vrot.slane %v1897, 2
  %v1899 = vadd.f32 %v1897, %v1898
  %v1900 = vrot.slane %v1899, 1
  %v1901 = vadd.f32 %v1899, %v1900
  %v1902 = vsel %vm259, %v1856, 0.0
  %v1903 = vrot.slane %v1902, 4
  %v1904 = vadd.f32 %v1902, %v1903
  %v1905 = vrot.slane %v1904, 2
  %v1906 = vadd.f32 %v1904, %v1905
  %v1907 = vrot.slane %v1906, 1
  %v1908 = vadd.f32 %v1906, %v1907
  %v1909 = vsel %vm259, %v1857, 0.0
  %v1910 = vrot.slane %v1909, 4
  %v1911 = vadd.f32 %v1909, %v1910
  %v1912 = vrot.slane %v1911, 2
  %v1913 = vadd.f32 %v1911, %v1912
  %v1914 = vrot.slane %v1913, 1
  %v1915 = vadd.f32 %v1913, %v1914
  %v1916 = vsel %vm259, %v1858, 0.0
  %v1917 = vrot.slane %v1916, 4
  %v1918 = vadd.f32 %v1916, %v1917
  %v1919 = vrot.slane %v1918, 2
  %v1920 = vadd.f32 %v1918, %v1919
  %v1921 = vrot.slane %v1920, 1
  %v1922 = vadd.f32 %v1920, %v1921
  %v1923 = vsel %vm259, %v1859, 0.0
  %v1924 = vrot.slane %v1923, 4
  %v1925 = vadd.f32 %v1923, %v1924
  %v1926 = vrot.slane %v1925, 2
  %v1927 = vadd.f32 %v1925, %v1926
  %v1928 = vrot.slane %v1927, 1
  %v1929 = vadd.f32 %v1927, %v1928
  %v1930 = vsel %vm259, %v1860, 0.0
  %v1931 = vrot.slane %v1930, 4
  %v1932 = vadd.f32 %v1930, %v1931
  %v1933 = vrot.slane %v1932, 2
  %v1934 = vadd.f32 %v1932, %v1933
  %v1935 = vrot.slane %v1934, 1
  %v1936 = vadd.f32 %v1934, %v1935
  %v1937 = vsel %vm259, %v1861, 0.0
  %v1938 = vrot.slane %v1937, 4
  %v1939 = vadd.f32 %v1937, %v1938
  %v1940 = vrot.slane %v1939, 2
  %v1941 = vadd.f32 %v1939, %v1940
  %v1942 = vrot.slane %v1941, 1
  %v1943 = vadd.f32 %v1941, %v1942
  %v1944 = vsel %vm259, %v1862, 0.0
  %v1945 = vrot.slane %v1944, 4
  %v1946 = vadd.f32 %v1944, %v1945
  %v1947 = vrot.slane %v1946, 2
  %v1948 = vadd.f32 %v1946, %v1947
  %v1949 = vrot.slane %v1948, 1
  %v1950 = vadd.f32 %v1948, %v1949
  %v1951 = vsel %vm259, %v1863, 0.0
  %v1952 = vrot.slane %v1951, 4
  %v1953 = vadd.f32 %v1951, %v1952
  %v1954 = vrot.slane %v1953, 2
  %v1955 = vadd.f32 %v1953, %v1954
  %v1956 = vrot.slane %v1955, 1
  %v1957 = vadd.f32 %v1955, %v1956
  %v1958 = vsel %vm259, %v1864, 0.0
  %v1959 = vrot.slane %v1958, 4
  %v1960 = vadd.f32 %v1958, %v1959
  %v1961 = vrot.slane %v1960, 2
  %v1962 = vadd.f32 %v1960, %v1961
  %v1963 = vrot.slane %v1962, 1
  %v1964 = vadd.f32 %v1962, %v1963
  %v1965 = vsel %vm259, %v1865, 0.0
  %v1966 = vrot.slane %v1965, 4
  %v1967 = vadd.f32 %v1965, %v1966
  %v1968 = vrot.slane %v1967, 2
  %v1969 = vadd.f32 %v1967, %v1968
  %v1970 = vrot.slane %v1969, 1
  %v1971 = vadd.f32 %v1969, %v1970
  %v1972 = vsel %vm259, %v1866, 0.0
  %v1973 = vrot.slane %v1972, 4
  %v1974 = vadd.f32 %v1972, %v1973
  %v1975 = vrot.slane %v1974, 2
  %v1976 = vadd.f32 %v1974, %v1975
  %v1977 = vrot.slane %v1976, 1
  %v1978 = vadd.f32 %v1976, %v1977
  %v1995 = vsel %vm1347, %v1880, %v1873
  %v1996 = vsel %vm1349, %v1887, %v1995
  %v1997 = vsel %vm1351, %v1894, %v1996
  %v1998 = vsel %vm1353, %v1901, %v1997
  %v1999 = vsel %vm1355, %v1908, %v1998
  %v2000 = vsel %vm1357, %v1915, %v1999
  %v2001 = vsel %vm1359, %v1922, %v2000
  %v2002 = vsel %vm1347, %v1936, %v1929
  %v2003 = vsel %vm1349, %v1943, %v2002
  %v2004 = vsel %vm1351, %v1950, %v2003
  %v2005 = vsel %vm1353, %v1957, %v2004
  %v2006 = vsel %vm1355, %v1964, %v2005
  %v2007 = vsel %vm1357, %v1971, %v2006
  %v2008 = vsel %vm1359, %v1978, %v2007
  %2011 = vst.msk [vmem:[%s16] sm:$0xff] %vm259, %v2001
  %2012 = vst.msk [vmem:[%s16 + $0x8] sm:$0xff] %vm259, %v2008
  %v2013 = vld [vmem:[%s12] sm:$0xf]
  %v2014 = vld [vmem:[%s12 + $0x4] sm:$0xf]
  %v2015 = vld [vmem:[%s12 + $0x8] sm:$0xf]
  %v2016 = vld [vmem:[%s12 + $0xc] sm:$0xf]
  %v2017 = vpack.c.bf16 %v1873, %v1873
  %v2018 = vpack.c.bf16 %v1880, %v1880
  %v2019 = vpack.c.bf16 %v1887, %v1887
  %v2020 = vpack.c.bf16 %v1894, %v1894
  %v2021 = vpack.c.bf16 %v1901, %v1901
  %v2022 = vpack.c.bf16 %v1908, %v1908
  %v2023 = vpack.c.bf16 %v1915, %v1915
  %v2024 = vpack.c.bf16 %v1922, %v1922
  %v2025 = vpack.c.bf16 %v1929, %v1929
  %v2026 = vpack.c.bf16 %v1936, %v1936
  %v2027 = vpack.c.bf16 %v1943, %v1943
  %v2028 = vpack.c.bf16 %v1950, %v1950
  %v2029 = vpack.c.bf16 %v1957, %v1957
  %v2030 = vpack.c.bf16 %v1964, %v1964
  %v2031 = vpack.c.bf16 %v1971, %v1971
  %v2032 = vpack.c.bf16 %v1978, %v1978
  %v2033 = vld [vmem:[%s13] sm:$0xf]
  %v2034 = vld [vmem:[%s13 + $0x4] sm:$0xf]
  %v2035 = vld [vmem:[%s13 + $0x8] sm:$0xf]
  %v2036 = vld [vmem:[%s13 + $0xc] sm:$0xf]
  %v2053 = vunpack.c.l.b16 %v2017
  %v2054 = vunpack.c.l.b16 %v2018
  %v2055 = vunpack.c.l.b16 %v2019
  %v2056 = vunpack.c.l.b16 %v2020
  %v2057 = vunpack.c.l.b16 %v2021
  %v2058 = vunpack.c.l.b16 %v2022
  %v2059 = vunpack.c.l.b16 %v2023
  %v2060 = vunpack.c.l.b16 %v2024
  %v2061 = vunpack.c.l.b16 %v2025
  %v2062 = vunpack.c.l.b16 %v2026
  %v2063 = vunpack.c.l.b16 %v2027
  %v2064 = vunpack.c.l.b16 %v2028
  %v2065 = vunpack.c.l.b16 %v2029
  %v2066 = vunpack.c.l.b16 %v2030
  %v2067 = vunpack.c.l.b16 %v2031
  %v2068 = vunpack.c.l.b16 %v2032
  %v2069 = vsel %vm1347, %v2054, %v2053
  %v2070 = vsel %vm1349, %v2055, %v2069
  %v2071 = vsel %vm1351, %v2056, %v2070
  %v2072 = vsel %vm1353, %v2057, %v2071
  %v2073 = vsel %vm1355, %v2058, %v2072
  %v2074 = vsel %vm1357, %v2059, %v2073
  %v2075 = vsel %vm1359, %v2060, %v2074
  %v2076 = vsel %vm1347, %v2062, %v2061
  %v2077 = vsel %vm1349, %v2063, %v2076
  %v2078 = vsel %vm1351, %v2064, %v2077
  %v2079 = vsel %vm1353, %v2065, %v2078
  %v2080 = vsel %vm1355, %v2066, %v2079
  %v2081 = vsel %vm1357, %v2067, %v2080
  %v2082 = vsel %vm1359, %v2068, %v2081
  %v2083 = vpack.c.b16 %v2082, %v2075
  %v2088 = vunpack.c.l.b16 %v2033
  %v2089 = vunpack.c.l.b16 %v2034
  %v2090 = vunpack.c.l.b16 %v2035
  %v2091 = vunpack.c.l.b16 %v2036
  %v2092 = vpack.c.b16 %v2089, %v2088
  %v2093 = vpack.c.b16 %v2091, %v2090
  %v2097 = vsel %vm259, %v2083, 0
  %2099 = vmatprep.subr.bf16.mxu0 0
  %2100 = vmatpush1.bf16.msra.mxu0 0
  %2101 = vmatprep.subr.bf16.mxu0 0
  %2102 = vmatpush1.bf16.msra.mxu0 0
  %2103 = vmatprep.subr.bf16.mxu0 0
  %2104 = vmatpush1.bf16.msra.mxu0 0
  %2105 = vmatprep.subr.bf16.mxu0 0
  %2106 = vmatpush1.bf16.msra.mxu0 0
  %2107 = vmatprep.subr.bf16.mxu0 0
  %2108 = vmatpush1.bf16.msra.mxu0 0
  %2109 = vmatprep.subr.bf16.mxu0 0
  %2110 = vmatpush1.bf16.msra.mxu0 0
  %2111 = vmatprep.subr.bf16.mxu0 0
  %2112 = vmatpush1.bf16.msra.mxu0 %v2093
  %2113 = vmatprep.subr.bf16.mxu0 0
  %2114 = vmatpush1.bf16.msra.mxu0 %v2092
  %2115 = vmatprep.subr.bf16.mxu0 0
  %2116 = vmatpush2.bf16.msra.mxu0 0
  %2117 = vmatprep.subr.bf16.mxu0 0
  %2118 = vmatpush2.bf16.msra.mxu0 0
  %2119 = vmatprep.subr.bf16.mxu0 0
  %2120 = vmatpush2.bf16.msra.mxu0 0
  %2121 = vmatprep.subr.bf16.mxu0 0
  %2122 = vmatpush2.bf16.msra.mxu0 0
  %2123 = vmatprep.subr.bf16.mxu0 0
  %2124 = vmatpush2.bf16.msra.mxu0 0
  %2125 = vmatprep.subr.bf16.mxu0 0
  %2126 = vmatpush2.bf16.msra.mxu0 0
  %2127 = vmatprep.subr.bf16.mxu0 0
  %2128 = vmatpush2.bf16.msra.mxu0 0
  %2129 = vmatprep.subr.bf16.mxu0 0
  %2130 = vmatpush2.bf16.msra.mxu0 0
  %2131 = vmatprep.mubr.bf16.mxu0 0
  %2132 = vmatmul.mubr.bf16.gmra.mxu0 %v2097
  %v2133 = vpop.f32.mrf.mxu0
  %v2134 = vadd.f32 0.0, %v2133
  %v2135 = vpop.f32.mrf.mxu0
  %v2136 = vpop.f32.mrf.mxu0
  %v2137 = vadd.f32 0.0, %v2136
  %v2138 = vpop.f32.mrf.mxu0
  %2139 = vdwg.mxu0
  %v2144 = vunpack.c.l.b16 %v2013
  %v2145 = vunpack.c.l.b16 %v2014
  %v2146 = vunpack.c.l.b16 %v2015
  %v2147 = vunpack.c.l.b16 %v2016
  %v2148 = vpack.c.b16 %v2145, %v2144
  %v2149 = vpack.c.b16 %v2147, %v2146
  %2152 = vmatprep.subr.bf16.mxu0 0
  %2153 = vmatpush1.bf16.msra.mxu0 0
  %2154 = vmatprep.subr.bf16.mxu0 0
  %2155 = vmatpush1.bf16.msra.mxu0 0
  %2156 = vmatprep.subr.bf16.mxu0 0
  %2157 = vmatpush1.bf16.msra.mxu0 0
  %2158 = vmatprep.subr.bf16.mxu0 0
  %2159 = vmatpush1.bf16.msra.mxu0 0
  %2160 = vmatprep.subr.bf16.mxu0 0
  %2161 = vmatpush1.bf16.msra.mxu0 0
  %2162 = vmatprep.subr.bf16.mxu0 0
  %2163 = vmatpush1.bf16.msra.mxu0 0
  %2164 = vmatprep.subr.bf16.mxu0 0
  %2165 = vmatpush1.bf16.msra.mxu0 %v2149
  %2166 = vmatprep.subr.bf16.mxu0 0
  %2167 = vmatpush1.bf16.msra.mxu0 %v2148
  %2168 = vmatprep.subr.bf16.mxu0 0
  %2169 = vmatpush2.bf16.msra.mxu0 0
  %2170 = vmatprep.subr.bf16.mxu0 0
  %2171 = vmatpush2.bf16.msra.mxu0 0
  %2172 = vmatprep.subr.bf16.mxu0 0
  %2173 = vmatpush2.bf16.msra.mxu0 0
  %2174 = vmatprep.subr.bf16.mxu0 0
  %2175 = vmatpush2.bf16.msra.mxu0 0
  %2176 = vmatprep.subr.bf16.mxu0 0
  %2177 = vmatpush2.bf16.msra.mxu0 0
  %2178 = vmatprep.subr.bf16.mxu0 0
  %2179 = vmatpush2.bf16.msra.mxu0 0
  %2180 = vmatprep.subr.bf16.mxu0 0
  %2181 = vmatpush2.bf16.msra.mxu0 0
  %2182 = vmatprep.subr.bf16.mxu0 0
  %2183 = vmatpush2.bf16.msra.mxu0 0
  %2184 = vmatprep.mubr.bf16.mxu0 0
  %2185 = vmatmul.mubr.bf16.gmra.mxu0 %v946
  %v2186 = vpop.f32.mrf.mxu0
  %v2187 = vadd.f32 %v2134, %v2186
  %v2188 = vpop.f32.mrf.mxu0
  %v2189 = vpop.f32.mrf.mxu0
  %v2190 = vadd.f32 %v2137, %v2189
  %v2191 = vpop.f32.mrf.mxu0
  %2192 = vdwg.mxu0
  %v2193 = vld [vmem:[%s14] sm:$0x1]
  %v2195 = vlaneseq
  %v2196 = vshrl.u32 %v2195, 7
  %v2197 = vsub.s32 0, %v2196
  %v2198 = vrot.slane %v2193, %v2197
  %v2200 = vadd.f32 %v2187, %v2198
  %v2201 = vadd.f32 %v2190, %v2198
  %v2202 = vtanh.pop %v2200
  %v2203 = vtanh.pop %v2201
  %v2204 = vpack.c.bf16 %v2203, %v2202
  %v2206 = vunpack.c.l.b16 %v2204
  %v2207 = vunpack.c.h.b16 %v2204
  %v2208 = vpack.c.b16 %v2206, %v2206
  %v2209 = vpack.c.b16 %v2207, %v2207
  %vm2212 = vcmask 257024
  %2213 = vst.msk [vmem:[%s17] sm:$0xf] %vm2212, %v2208
  %2214 = vst.msk [vmem:[%s17 + $0x4] sm:$0xf] %vm2212, %v2209
  // Predicated region
  $region62: #{attent_gru_decoder_forward.2} parent=0 // pred_check
    _
  $region63: #{attent_gru_decoder_forward.2} parent=0 // pred_check_branch
    %2216 = sbr.rel (0) target = $region65
  $region64: #{attent_gru_decoder_forward.2} parent=0 // pred_region
    _
  $region65: #{attent_gru_decoder_forward.2} parent=0 // pred_fallthru
    _
  // Predicated region
  $region66: #{attent_gru_decoder_forward.2} parent=0 // pred_check
    _
  $region67: #{attent_gru_decoder_forward.2} parent=0 // pred_check_branch
    %2218 = sbr.rel (0) target = $region69
  $region68: #{attent_gru_decoder_forward.2} parent=0 // pred_region
    _
  $region69: #{attent_gru_decoder_forward.2} parent=0 // pred_fallthru
    _
  // Predicated region
  $region70: #{attent_gru_decoder_forward.2} parent=0 // pred_check
    _
  $region71: #{attent_gru_decoder_forward.2} parent=0 // pred_check_branch
    %2220 = sbr.rel (0) target = $region73
  $region72: #{attent_gru_decoder_forward.2} parent=0 // pred_region
    _
  $region73: #{attent_gru_decoder_forward.2} parent=0 // pred_fallthru
    _
  // Predicated region
  $region74: #{attent_gru_decoder_forward.2} parent=0 // pred_check
    _
  $region75: #{attent_gru_decoder_forward.2} parent=0 // pred_check_branch
    %2222 = sbr.rel (0) target = $region77
  $region76: #{attent_gru_decoder_forward.2} parent=0 // pred_region
    _
  $region77: #{attent_gru_decoder_forward.2} parent=0 // pred_fallthru
    _
  // Predicated region
  $region78: #{attent_gru_decoder_forward.2} parent=0 // pred_check
    _
  $region79: #{attent_gru_decoder_forward.2} parent=0 // pred_check_branch
    %2224 = sbr.rel (0) target = $region81
  $region80: #{attent_gru_decoder_forward.2} parent=0 // pred_region
    _
  $region81: #{attent_gru_decoder_forward.2} parent=0 // pred_fallthru
    _
  // Predicated region
  $region82: #{attent_gru_decoder_forward.2} parent=0 // pred_check
    _
  $region83: #{attent_gru_decoder_forward.2} parent=0 // pred_check_branch
    %2226 = sbr.rel (0) target = $region85
  $region84: #{attent_gru_decoder_forward.2} parent=0 // pred_region
    _
  $region85: #{attent_gru_decoder_forward.2} parent=0 // pred_fallthru
    _

</llo_original>
